<compile_context>
chip_gen: v6e
topology: v6e:2x2x1
jax: 0.10.0
libtpu: 0.0.40
codegen_flags: <defaults>
</compile_context>

<pallas_src>
import functools

import jax
import jax.numpy as jnp
import numpy as np
from jax.experimental import pallas as pl
from jax.experimental.pallas import tpu as pltpu


def _elu(x):
    # ELU(alpha=1): x for x > 0, exp(x) - 1 otherwise (arg clamped so the
    # untaken branch of the where cannot overflow).
    return jnp.where(x > 0, x, jnp.exp(jnp.minimum(x, 0.0)) - 1.0)


def _conv_out_len(l, k=3, stride=1):
    return (l - k) // stride + 1


def news_classifier_kernel(x_ref,
                           w1_ref, b1_ref, w2_ref, b2_ref,
                           w3_ref, b3_ref, w4_ref, b4_ref,
                           wf1_ref, bf1_ref, wf2_ref, bf2_ref,
                           out_ref,
                           *, l0, bt, apply_softmax):
    """One batch block.  Conv activations are (L*Bt, C) rows; the FC head and
    the output are batch-on-lanes (H/K on sublanes, Bt on lanes)."""
    cdt = x_ref.dtype                      # MXU operand dtype (wrapper's choice)

    def conv_elu(x2d, lin, stride, w_ref, b_ref):
        # kernel_size=3 "valid" Conv1d as 3 accumulating matmuls
        #   y = sum_k (Lout*Bt, Cin) @ (Cin, Cout)   (no lane-axis im2col concat)
        cin = x2d.shape[-1]
        lout = _conv_out_len(lin, 3, stride)
        x3 = x2d.reshape(lin, bt, cin)     # leading-dim ops only below
        if stride == 1:
            taps = [x3[k:k + lout] for k in range(3)]
        else:  # stride == 2: output j reads rows 2j, 2j+1, 2j+2
            leven = lin
            if lin % 2:
                x3 = jnp.concatenate(
                    [x3, jnp.zeros((1, bt, cin), x3.dtype)], axis=0)
                leven = lin + 1
            x4 = x3.reshape(leven // 2, 2, bt, cin)
            even, odd = x4[:, 0], x4[:, 1]
            taps = [even[0:lout], odd[0:lout], even[1:lout + 1]]
        w = w_ref[...]                     # (3, Cin, Cout)
        acc = jnp.dot(taps[0].reshape(lout * bt, cin), w[0],
                      preferred_element_type=jnp.float32)
        acc = acc + jnp.dot(taps[1].reshape(lout * bt, cin), w[1],
                            preferred_element_type=jnp.float32)
        acc = acc + jnp.dot(taps[2].reshape(lout * bt, cin), w[2],
                            preferred_element_type=jnp.float32)
        y = _elu(acc + b_ref[...])         # (Lout*Bt, Cout) f32
        return y, lout

    x = x_ref[0]                                               # (l0*bt, E)
    y, l1 = conv_elu(x, l0, 1, w1_ref, b1_ref)
    y, l2 = conv_elu(y.astype(cdt), l1, 2, w2_ref, b2_ref)
    y, l3 = conv_elu(y.astype(cdt), l2, 2, w3_ref, b3_ref)
    y, l4 = conv_elu(y.astype(cdt), l3, 1, w4_ref, b4_ref)

    c = y.shape[-1]
    # avg_pool1d over the remaining length -> (Bt, C) f32
    feat = jnp.mean(y.reshape(l4, bt, c), axis=0)

    # TODO(synk): F.dropout (training-mode by default in the PyTorch forward)
    # is treated as identity (inference semantics / dropout_p = 0).

    # fc1: (H, Bt) = W1 (H, C) @ feat^T  -- transpose folded into the MXU.
    h = jax.lax.dot_general(wf1_ref[...], feat.astype(cdt),
                            (((1,), (1,)), ((), ())),
                            preferred_element_type=jnp.float32) + bf1_ref[...]
    h = jnp.maximum(h, 0.0)
    # fc2: (K, Bt) = W2 (K, H) @ h
    logits = jnp.dot(wf2_ref[...], h.astype(cdt),
                     preferred_element_type=jnp.float32) + bf2_ref[...]

    if apply_softmax:
        m = jnp.max(logits, axis=0, keepdims=True)
        ex = jnp.exp(logits - m)
        denom = jnp.sum(ex, axis=0, keepdims=True)
        logits = ex * pl.reciprocal(denom, approx=True)

    out_ref[0] = logits.astype(out_ref.dtype)   # lane-dense (K, block_b) slab


def _vmem_capacity_bytes():
    # Conservative fallback (v7x-like 64 MiB/TC) so the declared limit can
    # never exceed physical VMEM when the query is unavailable.
    try:
        cap = int(getattr(pltpu.get_tpu_info(), "vmem_capacity_bytes", 0))
        if cap > 0:
            return cap
    except Exception:
        pass
    return 64 << 20


def _padded_tile_bytes(rows, cols, itemsize):
    # (sublane, lane) tile padding: lanes -> 128, sublanes -> 8/16/32 by dtype.
    sub = {4: 8, 2: 16, 1: 32}.get(itemsize, 8)
    rows_p = -(-rows // sub) * sub
    cols_p = -(-cols // 128) * 128
    return rows_p * cols_p * itemsize


def news_classifier_forward(ids, params, *, apply_softmax=False,
                            block_b=None, mxu_dtype=jnp.bfloat16):
    """ids: (B, L) int32 token ids.  Returns (B, num_classes) float32."""
    B, L0 = ids.shape
    emb = params["emb"]
    V, E = emb.shape
    C = params["b1"].shape[0]
    H = params["b_fc1"].shape[0]
    K = params["b_fc2"].shape[0]
    cdt = mxu_dtype

    # conv-stack length bookkeeping (k=3; strides 1,2,2,1)
    L1 = _conv_out_len(L0, 3, 1)
    L2 = _conv_out_len(L1, 3, 2)
    L3 = _conv_out_len(L2, 3, 2)
    L4 = _conv_out_len(L3, 3, 1)
    assert L4 >= 1, "sequence too short for the conv stack"

    # ---- weight repacking (layout plumbing only) ----
    def conv_w(w):   # torch Conv1d weight (Cout, Cin, 3) -> (3, Cin, Cout)
        return jnp.transpose(w, (2, 1, 0)).astype(cdt)

    def row(v):      # conv bias -> (1, n) f32 (added to f32 accumulator rows)
        return v.astype(jnp.float32)[None, :]

    def col(v):      # fc bias -> (n, 1) f32 (batch-on-lanes FC head)
        return v.astype(jnp.float32)[:, None]

    weight_args = (
        conv_w(params["w1"]), row(params["b1"]),
        conv_w(params["w2"]), row(params["b2"]),
        conv_w(params["w3"]), row(params["b3"]),
        conv_w(params["w4"]), row(params["b4"]),
        params["w_fc1"].astype(cdt), col(params["b_fc1"]),
        params["w_fc2"].astype(cdt), col(params["b_fc2"]),
    )

    # ---- generation-aware batch tiling / VMEM budget ----
    Bpad = -(-B // 8) * 8                   # sublane-aligned batch blocks
    cap = _vmem_capacity_bytes()
    two_core = cap <= (96 << 20)            # v7x-like: 2 TCs, 64 MiB each
    it_c = np.dtype(cdt).itemsize

    def resident_bytes(bb):
        in_blk = _padded_tile_bytes(L0 * bb, E, it_c)
        out_blk = _padded_tile_bytes(K, bb, 4)
        w_tot = sum(_padded_tile_bytes(int(np.prod(a.shape[:-1])),
                                       int(a.shape[-1]),
                                       np.dtype(a.dtype).itemsize)
                    for a in weight_args)
        # peak live in-kernel temporaries (conv1 dominates): input + 3 taps +
        # f32 accumulator/output; extra factor covers later layers/fc/Mosaic.
        tmp = (_padded_tile_bytes(L0 * bb, E, it_c)
               + 3 * _padded_tile_bytes(L1 * bb, E, it_c)
               + 6 * _padded_tile_bytes(L1 * bb, C, 4))
        return 2 * (in_blk + out_blk) + 2 * w_tot + int(1.5 * tmp)

    if block_b is None:
        divs = sorted([d for d in range(8, Bpad + 1, 8) if Bpad % d == 0],
                      reverse=True)
        cands = [d for d in divs if d <= 1024] or divs[-1:]
        budget = int(0.75 * cap)

        def first_fit(ds):
            for d in ds:
                if resident_bytes(d) <= budget:
                    return d
            return None

        if two_core:   # give each TensorCore >= 2 pipelined steps if possible
            block_b = (first_fit([d for d in cands if Bpad // d >= 4])
                       or first_fit(cands) or cands[-1])
        else:          # single TC: fewest, largest steps
            block_b = first_fit(cands) or cands[-1]
    assert Bpad % block_b == 0
    nb = Bpad // block_b

    vmem_limit = int(min(int(0.85 * cap),
                         max(32 << 20, int(1.3 * resident_bytes(block_b)))))

    # ---- embedding lookup (XLA gather == nn.Embedding) + block layout ----
    # TODO(synk): for huge vocabularies move this in-kernel (emb in pl.ANY,
    # scalar-prefetched ids, make_async_copy row gather).
    x = jnp.take(emb.astype(cdt), ids.astype(jnp.int32), axis=0)  # (B, L0, E)
    if Bpad > B:
        x = jnp.concatenate(
            [x, jnp.zeros((Bpad - B, L0, E), x.dtype)], axis=0)
    x_blk = (x.reshape(nb, block_b, L0, E)
               .transpose(0, 2, 1, 3)       # length-major inside a block
               .reshape(nb, L0 * block_b, E))

    def whole(a):   # full-array block, constant block index (never re-DMA'd)
        zeros = (0,) * a.ndim
        return pl.BlockSpec(a.shape, lambda b, _z=zeros: _z)

    in_specs = [pl.BlockSpec((1, L0 * block_b, E), lambda b: (b, 0, 0))]
    in_specs += [whole(a) for a in weight_args]
    out_specs = pl.BlockSpec((1, K, block_b), lambda b: (b, 0, 0))

    flops = 2 * Bpad * (L1 * 3 * E * C + (L2 + L3 + L4) * 3 * C * C
                        + C * H + H * K)
    transcendentals = Bpad * (L1 + L2 + L3 + L4) * C \
        + (Bpad * K if apply_softmax else 0)
    nbytes = lambda a: a.size * a.dtype.itemsize
    bytes_accessed = nbytes(x_blk) + sum(nbytes(a) for a in weight_args) \
        + Bpad * K * 4

    kernel = functools.partial(news_classifier_kernel,
                               l0=L0, bt=block_b,
                               apply_softmax=apply_softmax)

    out = pl.pallas_call(
        kernel,
        out_shape=jax.ShapeDtypeStruct((nb, K, block_b), jnp.float32),
        grid=(nb,),
        in_specs=in_specs,
        out_specs=out_specs,
        compiler_params=pltpu.CompilerParams(
            dimension_semantics=("parallel",),
            vmem_limit_bytes=vmem_limit),
        cost_estimate=pl.CostEstimate(
            flops=int(flops),
            transcendentals=int(transcendentals),
            bytes_accessed=int(bytes_accessed)),
    )(x_blk, *weight_args)

    return out.transpose(0, 2, 1).reshape(Bpad, K)[:B]


def init_params(key, V, E, C, H, K):
    ks = jax.random.split(key, 12)

    def u(k, shape, fan_in):
        s = 1.0 / np.sqrt(fan_in)
        return jax.random.uniform(k, shape, jnp.float32, -s, s)

    emb = jax.random.normal(ks[0], (V, E), jnp.float32)
    emb = emb.at[0].set(0.0)  # padding_idx=0 row is zero
    return dict(
        emb=emb,
        w1=u(ks[1], (C, E, 3), E * 3), b1=u(ks[2], (C,), E * 3),
        w2=u(ks[3], (C, C, 3), C * 3), b2=u(ks[4], (C,), C * 3),
        w3=u(ks[5], (C, C, 3), C * 3), b3=u(ks[6], (C,), C * 3),
        w4=u(ks[7], (C, C, 3), C * 3), b4=u(ks[8], (C,), C * 3),
        w_fc1=u(ks[9], (H, C), C), b_fc1=u(ks[10], (H,), C),
        w_fc2=u(ks[11], (K, H), H), b_fc2=jnp.zeros((K,), jnp.float32),
    )


def reference_forward(ids, p, apply_softmax=False):
    """Pure-JAX reference mirroring the PyTorch forward (dropout = identity)."""
    x = p["emb"][ids]                        # (B, L, E)
    x = jnp.transpose(x, (0, 2, 1))          # (B, E, L)  == NCL

    def conv(x, w, b, stride):
        y = jax.lax.conv_general_dilated(
            x, w, window_strides=(stride,), padding="VALID",
            dimension_numbers=("NCH", "OIH", "NCH"))
        return y + b[None, :, None]

    x = _elu(conv(x, p["w1"], p["b1"], 1))
    x = _elu(conv(x, p["w2"], p["b2"], 2))
    x = _elu(conv(x, p["w3"], p["b3"], 2))
    x = _elu(conv(x, p["w4"], p["b4"], 1))
    feat = jnp.mean(x, axis=2)               # avg_pool1d over full length
    h = jnp.maximum(feat @ p["w_fc1"].T + p["b_fc1"], 0.0)
    logits = h @ p["w_fc2"].T + p["b_fc2"]
    if apply_softmax:
        logits = jax.nn.softmax(logits, axis=1)
    return logits


if __name__ == "__main__":
    B, L, V = 8, 32, 50              # batch, seq len, vocab
    E, C, H, K = 16, 8, 32, 4        # embedding, channels, hidden, classes

    key = jax.random.PRNGKey(0)
    k_ids, k_par = jax.random.split(key)
    ids = jax.random.randint(k_ids, (B, L), 0, V, dtype=jnp.int32)
    params = init_params(k_par, V, E, C, H, K)

    ref = reference_forward(ids, params, apply_softmax=False)

    # f32 MXU operands: tight check against the fp32 reference.
    out32 = jax.block_until_ready(
        news_classifier_forward(ids, params, apply_softmax=False,
                                mxu_dtype=jnp.float32))
    np.testing.assert_allclose(np.asarray(out32), np.asarray(ref),
                               rtol=1e-3, atol=1e-3)

    # Default bf16 MXU operands (f32 accumulation): documented looser tolerance.
    out16 = jax.block_until_ready(
        news_classifier_forward(ids, params, apply_softmax=False))
    np.testing.assert_allclose(np.asarray(out16), np.asarray(ref),
                               rtol=5e-2, atol=5e-2)

    # Softmax head exercised once as well.
    sm = jax.block_until_ready(
        news_classifier_forward(ids, params, apply_softmax=True,
                                mxu_dtype=jnp.float32))
    ref_sm = reference_forward(ids, params, apply_softmax=True)
    np.testing.assert_allclose(np.asarray(sm), np.asarray(ref_sm),
                               rtol=1e-2, atol=1e-2)

    print("KERNEL_OK")
</pallas_src>

<mosaic_0001>
module attributes {stable_mosaic.version = 11 : i64} {
  func.func @news_classifier_kernel(%arg0: i32, %arg1: memref<1x256x16xf32, #tpu.memory_space<vmem>>, %arg2: memref<3x16x8xf32, #tpu.memory_space<vmem>>, %arg3: memref<1x8xf32, #tpu.memory_space<vmem>>, %arg4: memref<3x8x8xf32, #tpu.memory_space<vmem>>, %arg5: memref<1x8xf32, #tpu.memory_space<vmem>>, %arg6: memref<3x8x8xf32, #tpu.memory_space<vmem>>, %arg7: memref<1x8xf32, #tpu.memory_space<vmem>>, %arg8: memref<3x8x8xf32, #tpu.memory_space<vmem>>, %arg9: memref<1x8xf32, #tpu.memory_space<vmem>>, %arg10: memref<32x8xf32, #tpu.memory_space<vmem>>, %arg11: memref<32x1xf32, #tpu.memory_space<vmem>>, %arg12: memref<4x32xf32, #tpu.memory_space<vmem>>, %arg13: memref<4x1xf32, #tpu.memory_space<vmem>>, %arg14: memref<1x4x8xf32, #tpu.memory_space<vmem>>) attributes {dimension_semantics = [#tpu.dimension_semantics<parallel>], iteration_bounds = array<i64: 1>, scalar_prefetch = 0 : i64, scratch_operands = 0 : i64, tpu.core_type = #tpu.core_type<tc>, window_params = [{transform_indices = @transform_0, window_bounds = array<i64: 1, 256, 16>}, {pipeline_mode = #tpu.pipeline_mode<synchronous>, transform_indices = @transform_1, window_bounds = array<i64: 3, 16, 8>}, {pipeline_mode = #tpu.pipeline_mode<synchronous>, transform_indices = @transform_2, window_bounds = array<i64: 1, 8>}, {pipeline_mode = #tpu.pipeline_mode<synchronous>, transform_indices = @transform_3, window_bounds = array<i64: 3, 8, 8>}, {pipeline_mode = #tpu.pipeline_mode<synchronous>, transform_indices = @transform_4, window_bounds = array<i64: 1, 8>}, {pipeline_mode = #tpu.pipeline_mode<synchronous>, transform_indices = @transform_5, window_bounds = array<i64: 3, 8, 8>}, {pipeline_mode = #tpu.pipeline_mode<synchronous>, transform_indices = @transform_6, window_bounds = array<i64: 1, 8>}, {pipeline_mode = #tpu.pipeline_mode<synchronous>, transform_indices = @transform_7, window_bounds = array<i64: 3, 8, 8>}, {pipeline_mode = #tpu.pipeline_mode<synchronous>, transform_indices = @transform_8, window_bounds = array<i64: 1, 8>}, {pipeline_mode = #tpu.pipeline_mode<synchronous>, transform_indices = @transform_9, window_bounds = array<i64: 32, 8>}, {pipeline_mode = #tpu.pipeline_mode<synchronous>, transform_indices = @transform_10, window_bounds = array<i64: 32, 1>}, {pipeline_mode = #tpu.pipeline_mode<synchronous>, transform_indices = @transform_11, window_bounds = array<i64: 4, 32>}, {pipeline_mode = #tpu.pipeline_mode<synchronous>, transform_indices = @transform_12, window_bounds = array<i64: 4, 1>}, {transform_indices = @transform_13, window_bounds = array<i64: 1, 4, 8>}]} {
    %c0 = arith.constant 0 : index
    %c0_0 = arith.constant 0 : index
    %c0_1 = arith.constant 0 : index
    %0 = vector.load %arg1[%c0, %c0_0, %c0_1] : memref<1x256x16xf32, #tpu.memory_space<vmem>>, vector<1x256x16xf32>
    %1 = vector.shape_cast %0 : vector<1x256x16xf32> to vector<256x16xf32>
    %2 = vector.shape_cast %1 : vector<256x16xf32> to vector<32x8x16xf32>
    %3 = vector.extract_strided_slice %2 {offsets = [0, 0, 0], sizes = [30, 8, 16], strides = [1, 1, 1]} : vector<32x8x16xf32> to vector<30x8x16xf32>
    %4 = vector.extract_strided_slice %2 {offsets = [1, 0, 0], sizes = [30, 8, 16], strides = [1, 1, 1]} : vector<32x8x16xf32> to vector<30x8x16xf32>
    %5 = vector.extract_strided_slice %2 {offsets = [2, 0, 0], sizes = [30, 8, 16], strides = [1, 1, 1]} : vector<32x8x16xf32> to vector<30x8x16xf32>
    %c0_2 = arith.constant 0 : index
    %c0_3 = arith.constant 0 : index
    %c0_4 = arith.constant 0 : index
    %6 = vector.load %arg2[%c0_2, %c0_3, %c0_4] : memref<3x16x8xf32, #tpu.memory_space<vmem>>, vector<3x16x8xf32>
    %7 = vector.shape_cast %3 : vector<30x8x16xf32> to vector<240x16xf32>
    %8 = vector.extract_strided_slice %6 {offsets = [0, 0, 0], sizes = [1, 16, 8], strides = [1, 1, 1]} : vector<3x16x8xf32> to vector<1x16x8xf32>
    %9 = vector.shape_cast %8 : vector<1x16x8xf32> to vector<16x8xf32>
    %cst = arith.constant dense<0.000000e+00> : vector<240x8xf32>
    %10 = tpu.matmul %7, %9, %cst {dimension_numbers = #tpu.dot_dimension_numbers<[1], [0], [0], [1], [0, 0, 1, 1], [], []>} : vector<240x16xf32>, vector<16x8xf32>, vector<240x8xf32> -> vector<240x8xf32>
    %11 = vector.shape_cast %4 : vector<30x8x16xf32> to vector<240x16xf32>
    %12 = vector.extract_strided_slice %6 {offsets = [1, 0, 0], sizes = [1, 16, 8], strides = [1, 1, 1]} : vector<3x16x8xf32> to vector<1x16x8xf32>
    %13 = vector.shape_cast %12 : vector<1x16x8xf32> to vector<16x8xf32>
    %cst_5 = arith.constant dense<0.000000e+00> : vector<240x8xf32>
    %14 = tpu.matmul %11, %13, %cst_5 {dimension_numbers = #tpu.dot_dimension_numbers<[1], [0], [0], [1], [0, 0, 1, 1], [], []>} : vector<240x16xf32>, vector<16x8xf32>, vector<240x8xf32> -> vector<240x8xf32>
    %15 = arith.addf %10, %14 : vector<240x8xf32>
    %16 = vector.shape_cast %5 : vector<30x8x16xf32> to vector<240x16xf32>
    %17 = vector.extract_strided_slice %6 {offsets = [2, 0, 0], sizes = [1, 16, 8], strides = [1, 1, 1]} : vector<3x16x8xf32> to vector<1x16x8xf32>
    %18 = vector.shape_cast %17 : vector<1x16x8xf32> to vector<16x8xf32>
    %cst_6 = arith.constant dense<0.000000e+00> : vector<240x8xf32>
    %19 = tpu.matmul %16, %18, %cst_6 {dimension_numbers = #tpu.dot_dimension_numbers<[1], [0], [0], [1], [0, 0, 1, 1], [], []>} : vector<240x16xf32>, vector<16x8xf32>, vector<240x8xf32> -> vector<240x8xf32>
    %20 = arith.addf %15, %19 : vector<240x8xf32>
    %c0_7 = arith.constant 0 : index
    %c0_8 = arith.constant 0 : index
    %21 = vector.load %arg3[%c0_7, %c0_8] : memref<1x8xf32, #tpu.memory_space<vmem>>, vector<1x8xf32>
    %22 = vector.broadcast %21 : vector<1x8xf32> to vector<240x8xf32>
    %23 = arith.addf %20, %22 : vector<240x8xf32>
    %cst_9 = arith.constant 0.000000e+00 : f32
    %24 = vector.broadcast %cst_9 : f32 to vector<240x8xf32>
    %25 = arith.cmpf ogt, %23, %24 : vector<240x8xf32>
    %cst_10 = arith.constant 0.000000e+00 : f32
    %26 = vector.broadcast %cst_10 : f32 to vector<240x8xf32>
    %27 = arith.minimumf %23, %26 : vector<240x8xf32>
    %28 = math.exp %27 : vector<240x8xf32>
    %cst_11 = arith.constant 1.000000e+00 : f32
    %29 = vector.broadcast %cst_11 : f32 to vector<240x8xf32>
    %30 = arith.subf %28, %29 : vector<240x8xf32>
    %31 = arith.select %25, %23, %30 : vector<240x8xi1>, vector<240x8xf32>
    %32 = vector.shape_cast %31 : vector<240x8xf32> to vector<30x8x8xf32>
    %33 = vector.shape_cast %32 : vector<30x8x8xf32> to vector<15x2x8x8xf32>
    %34 = vector.extract_strided_slice %33 {offsets = [0, 0, 0, 0], sizes = [15, 1, 8, 8], strides = [1, 1, 1, 1]} : vector<15x2x8x8xf32> to vector<15x1x8x8xf32>
    %35 = vector.shape_cast %34 : vector<15x1x8x8xf32> to vector<15x8x8xf32>
    %36 = vector.extract_strided_slice %33 {offsets = [0, 1, 0, 0], sizes = [15, 1, 8, 8], strides = [1, 1, 1, 1]} : vector<15x2x8x8xf32> to vector<15x1x8x8xf32>
    %37 = vector.shape_cast %36 : vector<15x1x8x8xf32> to vector<15x8x8xf32>
    %38 = vector.extract_strided_slice %35 {offsets = [0, 0, 0], sizes = [14, 8, 8], strides = [1, 1, 1]} : vector<15x8x8xf32> to vector<14x8x8xf32>
    %39 = vector.extract_strided_slice %37 {offsets = [0, 0, 0], sizes = [14, 8, 8], strides = [1, 1, 1]} : vector<15x8x8xf32> to vector<14x8x8xf32>
    %40 = vector.extract_strided_slice %35 {offsets = [1, 0, 0], sizes = [14, 8, 8], strides = [1, 1, 1]} : vector<15x8x8xf32> to vector<14x8x8xf32>
    %c0_12 = arith.constant 0 : index
    %c0_13 = arith.constant 0 : index
    %c0_14 = arith.constant 0 : index
    %41 = vector.load %arg4[%c0_12, %c0_13, %c0_14] : memref<3x8x8xf32, #tpu.memory_space<vmem>>, vector<3x8x8xf32>
    %42 = vector.shape_cast %38 : vector<14x8x8xf32> to vector<112x8xf32>
    %43 = vector.extract_strided_slice %41 {offsets = [0, 0, 0], sizes = [1, 8, 8], strides = [1, 1, 1]} : vector<3x8x8xf32> to vector<1x8x8xf32>
    %44 = vector.shape_cast %43 : vector<1x8x8xf32> to vector<8x8xf32>
    %cst_15 = arith.constant dense<0.000000e+00> : vector<112x8xf32>
    %45 = tpu.matmul %42, %44, %cst_15 {dimension_numbers = #tpu.dot_dimension_numbers<[1], [0], [0], [1], [0, 0, 1, 1], [], []>} : vector<112x8xf32>, vector<8x8xf32>, vector<112x8xf32> -> vector<112x8xf32>
    %46 = vector.shape_cast %39 : vector<14x8x8xf32> to vector<112x8xf32>
    %47 = vector.extract_strided_slice %41 {offsets = [1, 0, 0], sizes = [1, 8, 8], strides = [1, 1, 1]} : vector<3x8x8xf32> to vector<1x8x8xf32>
    %48 = vector.shape_cast %47 : vector<1x8x8xf32> to vector<8x8xf32>
    %cst_16 = arith.constant dense<0.000000e+00> : vector<112x8xf32>
    %49 = tpu.matmul %46, %48, %cst_16 {dimension_numbers = #tpu.dot_dimension_numbers<[1], [0], [0], [1], [0, 0, 1, 1], [], []>} : vector<112x8xf32>, vector<8x8xf32>, vector<112x8xf32> -> vector<112x8xf32>
    %50 = arith.addf %45, %49 : vector<112x8xf32>
    %51 = vector.shape_cast %40 : vector<14x8x8xf32> to vector<112x8xf32>
    %52 = vector.extract_strided_slice %41 {offsets = [2, 0, 0], sizes = [1, 8, 8], strides = [1, 1, 1]} : vector<3x8x8xf32> to vector<1x8x8xf32>
    %53 = vector.shape_cast %52 : vector<1x8x8xf32> to vector<8x8xf32>
    %cst_17 = arith.constant dense<0.000000e+00> : vector<112x8xf32>
    %54 = tpu.matmul %51, %53, %cst_17 {dimension_numbers = #tpu.dot_dimension_numbers<[1], [0], [0], [1], [0, 0, 1, 1], [], []>} : vector<112x8xf32>, vector<8x8xf32>, vector<112x8xf32> -> vector<112x8xf32>
    %55 = arith.addf %50, %54 : vector<112x8xf32>
    %c0_18 = arith.constant 0 : index
    %c0_19 = arith.constant 0 : index
    %56 = vector.load %arg5[%c0_18, %c0_19] : memref<1x8xf32, #tpu.memory_space<vmem>>, vector<1x8xf32>
    %57 = vector.broadcast %56 : vector<1x8xf32> to vector<112x8xf32>
    %58 = arith.addf %55, %57 : vector<112x8xf32>
    %cst_20 = arith.constant 0.000000e+00 : f32
    %59 = vector.broadcast %cst_20 : f32 to vector<112x8xf32>
    %60 = arith.cmpf ogt, %58, %59 : vector<112x8xf32>
    %cst_21 = arith.constant 0.000000e+00 : f32
    %61 = vector.broadcast %cst_21 : f32 to vector<112x8xf32>
    %62 = arith.minimumf %58, %61 : vector<112x8xf32>
    %63 = math.exp %62 : vector<112x8xf32>
    %cst_22 = arith.constant 1.000000e+00 : f32
    %64 = vector.broadcast %cst_22 : f32 to vector<112x8xf32>
    %65 = arith.subf %63, %64 : vector<112x8xf32>
    %66 = arith.select %60, %58, %65 : vector<112x8xi1>, vector<112x8xf32>
    %67 = vector.shape_cast %66 : vector<112x8xf32> to vector<14x8x8xf32>
    %68 = vector.shape_cast %67 : vector<14x8x8xf32> to vector<7x2x8x8xf32>
    %69 = vector.extract_strided_slice %68 {offsets = [0, 0, 0, 0], sizes = [7, 1, 8, 8], strides = [1, 1, 1, 1]} : vector<7x2x8x8xf32> to vector<7x1x8x8xf32>
    %70 = vector.shape_cast %69 : vector<7x1x8x8xf32> to vector<7x8x8xf32>
    %71 = vector.extract_strided_slice %68 {offsets = [0, 1, 0, 0], sizes = [7, 1, 8, 8], strides = [1, 1, 1, 1]} : vector<7x2x8x8xf32> to vector<7x1x8x8xf32>
    %72 = vector.shape_cast %71 : vector<7x1x8x8xf32> to vector<7x8x8xf32>
    %73 = vector.extract_strided_slice %70 {offsets = [0, 0, 0], sizes = [6, 8, 8], strides = [1, 1, 1]} : vector<7x8x8xf32> to vector<6x8x8xf32>
    %74 = vector.extract_strided_slice %72 {offsets = [0, 0, 0], sizes = [6, 8, 8], strides = [1, 1, 1]} : vector<7x8x8xf32> to vector<6x8x8xf32>
    %75 = vector.extract_strided_slice %70 {offsets = [1, 0, 0], sizes = [6, 8, 8], strides = [1, 1, 1]} : vector<7x8x8xf32> to vector<6x8x8xf32>
    %c0_23 = arith.constant 0 : index
    %c0_24 = arith.constant 0 : index
    %c0_25 = arith.constant 0 : index
    %76 = vector.load %arg6[%c0_23, %c0_24, %c0_25] : memref<3x8x8xf32, #tpu.memory_space<vmem>>, vector<3x8x8xf32>
    %77 = vector.shape_cast %73 : vector<6x8x8xf32> to vector<48x8xf32>
    %78 = vector.extract_strided_slice %76 {offsets = [0, 0, 0], sizes = [1, 8, 8], strides = [1, 1, 1]} : vector<3x8x8xf32> to vector<1x8x8xf32>
    %79 = vector.shape_cast %78 : vector<1x8x8xf32> to vector<8x8xf32>
    %cst_26 = arith.constant dense<0.000000e+00> : vector<48x8xf32>
    %80 = tpu.matmul %77, %79, %cst_26 {dimension_numbers = #tpu.dot_dimension_numbers<[1], [0], [0], [1], [0, 0, 1, 1], [], []>} : vector<48x8xf32>, vector<8x8xf32>, vector<48x8xf32> -> vector<48x8xf32>
    %81 = vector.shape_cast %74 : vector<6x8x8xf32> to vector<48x8xf32>
    %82 = vector.extract_strided_slice %76 {offsets = [1, 0, 0], sizes = [1, 8, 8], strides = [1, 1, 1]} : vector<3x8x8xf32> to vector<1x8x8xf32>
    %83 = vector.shape_cast %82 : vector<1x8x8xf32> to vector<8x8xf32>
    %cst_27 = arith.constant dense<0.000000e+00> : vector<48x8xf32>
    %84 = tpu.matmul %81, %83, %cst_27 {dimension_numbers = #tpu.dot_dimension_numbers<[1], [0], [0], [1], [0, 0, 1, 1], [], []>} : vector<48x8xf32>, vector<8x8xf32>, vector<48x8xf32> -> vector<48x8xf32>
    %85 = arith.addf %80, %84 : vector<48x8xf32>
    %86 = vector.shape_cast %75 : vector<6x8x8xf32> to vector<48x8xf32>
    %87 = vector.extract_strided_slice %76 {offsets = [2, 0, 0], sizes = [1, 8, 8], strides = [1, 1, 1]} : vector<3x8x8xf32> to vector<1x8x8xf32>
    %88 = vector.shape_cast %87 : vector<1x8x8xf32> to vector<8x8xf32>
    %cst_28 = arith.constant dense<0.000000e+00> : vector<48x8xf32>
    %89 = tpu.matmul %86, %88, %cst_28 {dimension_numbers = #tpu.dot_dimension_numbers<[1], [0], [0], [1], [0, 0, 1, 1], [], []>} : vector<48x8xf32>, vector<8x8xf32>, vector<48x8xf32> -> vector<48x8xf32>
    %90 = arith.addf %85, %89 : vector<48x8xf32>
    %c0_29 = arith.constant 0 : index
    %c0_30 = arith.constant 0 : index
    %91 = vector.load %arg7[%c0_29, %c0_30] : memref<1x8xf32, #tpu.memory_space<vmem>>, vector<1x8xf32>
    %92 = vector.broadcast %91 : vector<1x8xf32> to vector<48x8xf32>
    %93 = arith.addf %90, %92 : vector<48x8xf32>
    %cst_31 = arith.constant 0.000000e+00 : f32
    %94 = vector.broadcast %cst_31 : f32 to vector<48x8xf32>
    %95 = arith.cmpf ogt, %93, %94 : vector<48x8xf32>
    %cst_32 = arith.constant 0.000000e+00 : f32
    %96 = vector.broadcast %cst_32 : f32 to vector<48x8xf32>
    %97 = arith.minimumf %93, %96 : vector<48x8xf32>
    %98 = math.exp %97 : vector<48x8xf32>
    %cst_33 = arith.constant 1.000000e+00 : f32
    %99 = vector.broadcast %cst_33 : f32 to vector<48x8xf32>
    %100 = arith.subf %98, %99 : vector<48x8xf32>
    %101 = arith.select %95, %93, %100 : vector<48x8xi1>, vector<48x8xf32>
    %102 = vector.shape_cast %101 : vector<48x8xf32> to vector<6x8x8xf32>
    %103 = vector.extract_strided_slice %102 {offsets = [0, 0, 0], sizes = [4, 8, 8], strides = [1, 1, 1]} : vector<6x8x8xf32> to vector<4x8x8xf32>
    %104 = vector.extract_strided_slice %102 {offsets = [1, 0, 0], sizes = [4, 8, 8], strides = [1, 1, 1]} : vector<6x8x8xf32> to vector<4x8x8xf32>
    %105 = vector.extract_strided_slice %102 {offsets = [2, 0, 0], sizes = [4, 8, 8], strides = [1, 1, 1]} : vector<6x8x8xf32> to vector<4x8x8xf32>
    %c0_34 = arith.constant 0 : index
    %c0_35 = arith.constant 0 : index
    %c0_36 = arith.constant 0 : index
    %106 = vector.load %arg8[%c0_34, %c0_35, %c0_36] : memref<3x8x8xf32, #tpu.memory_space<vmem>>, vector<3x8x8xf32>
    %107 = vector.shape_cast %103 : vector<4x8x8xf32> to vector<32x8xf32>
    %108 = vector.extract_strided_slice %106 {offsets = [0, 0, 0], sizes = [1, 8, 8], strides = [1, 1, 1]} : vector<3x8x8xf32> to vector<1x8x8xf32>
    %109 = vector.shape_cast %108 : vector<1x8x8xf32> to vector<8x8xf32>
    %cst_37 = arith.constant dense<0.000000e+00> : vector<32x8xf32>
    %110 = tpu.matmul %107, %109, %cst_37 {dimension_numbers = #tpu.dot_dimension_numbers<[1], [0], [0], [1], [0, 0, 1, 1], [], []>} : vector<32x8xf32>, vector<8x8xf32>, vector<32x8xf32> -> vector<32x8xf32>
    %111 = vector.shape_cast %104 : vector<4x8x8xf32> to vector<32x8xf32>
    %112 = vector.extract_strided_slice %106 {offsets = [1, 0, 0], sizes = [1, 8, 8], strides = [1, 1, 1]} : vector<3x8x8xf32> to vector<1x8x8xf32>
    %113 = vector.shape_cast %112 : vector<1x8x8xf32> to vector<8x8xf32>
    %cst_38 = arith.constant dense<0.000000e+00> : vector<32x8xf32>
    %114 = tpu.matmul %111, %113, %cst_38 {dimension_numbers = #tpu.dot_dimension_numbers<[1], [0], [0], [1], [0, 0, 1, 1], [], []>} : vector<32x8xf32>, vector<8x8xf32>, vector<32x8xf32> -> vector<32x8xf32>
    %115 = arith.addf %110, %114 : vector<32x8xf32>
    %116 = vector.shape_cast %105 : vector<4x8x8xf32> to vector<32x8xf32>
    %117 = vector.extract_strided_slice %106 {offsets = [2, 0, 0], sizes = [1, 8, 8], strides = [1, 1, 1]} : vector<3x8x8xf32> to vector<1x8x8xf32>
    %118 = vector.shape_cast %117 : vector<1x8x8xf32> to vector<8x8xf32>
    %cst_39 = arith.constant dense<0.000000e+00> : vector<32x8xf32>
    %119 = tpu.matmul %116, %118, %cst_39 {dimension_numbers = #tpu.dot_dimension_numbers<[1], [0], [0], [1], [0, 0, 1, 1], [], []>} : vector<32x8xf32>, vector<8x8xf32>, vector<32x8xf32> -> vector<32x8xf32>
    %120 = arith.addf %115, %119 : vector<32x8xf32>
    %c0_40 = arith.constant 0 : index
    %c0_41 = arith.constant 0 : index
    %121 = vector.load %arg9[%c0_40, %c0_41] : memref<1x8xf32, #tpu.memory_space<vmem>>, vector<1x8xf32>
    %122 = vector.broadcast %121 : vector<1x8xf32> to vector<32x8xf32>
    %123 = arith.addf %120, %122 : vector<32x8xf32>
    %cst_42 = arith.constant 0.000000e+00 : f32
    %124 = vector.broadcast %cst_42 : f32 to vector<32x8xf32>
    %125 = arith.cmpf ogt, %123, %124 : vector<32x8xf32>
    %cst_43 = arith.constant 0.000000e+00 : f32
    %126 = vector.broadcast %cst_43 : f32 to vector<32x8xf32>
    %127 = arith.minimumf %123, %126 : vector<32x8xf32>
    %128 = math.exp %127 : vector<32x8xf32>
    %cst_44 = arith.constant 1.000000e+00 : f32
    %129 = vector.broadcast %cst_44 : f32 to vector<32x8xf32>
    %130 = arith.subf %128, %129 : vector<32x8xf32>
    %131 = arith.select %125, %123, %130 : vector<32x8xi1>, vector<32x8xf32>
    %132 = vector.shape_cast %131 : vector<32x8xf32> to vector<4x8x8xf32>
    %cst_45 = arith.constant dense<0.000000e+00> : vector<8x8xf32>
    %133 = vector.multi_reduction <add>, %132, %cst_45 [0] : vector<4x8x8xf32> to vector<8x8xf32>
    %cst_46 = arith.constant 4.000000e+00 : f32
    %134 = vector.broadcast %cst_46 : f32 to vector<8x8xf32>
    %135 = arith.divf %133, %134 : vector<8x8xf32>
    %c0_47 = arith.constant 0 : index
    %c0_48 = arith.constant 0 : index
    %136 = vector.load %arg10[%c0_47, %c0_48] : memref<32x8xf32, #tpu.memory_space<vmem>>, vector<32x8xf32>
    %cst_49 = arith.constant dense<0.000000e+00> : vector<32x8xf32>
    %137 = tpu.matmul %136, %135, %cst_49 {dimension_numbers = #tpu.dot_dimension_numbers<[1], [1], [0], [0], [0, 0, 1, 0], [], []>} : vector<32x8xf32>, vector<8x8xf32>, vector<32x8xf32> -> vector<32x8xf32>
    %c0_50 = arith.constant 0 : index
    %c0_51 = arith.constant 0 : index
    %138 = vector.load %arg11[%c0_50, %c0_51] : memref<32x1xf32, #tpu.memory_space<vmem>>, vector<32x1xf32>
    %139 = vector.broadcast %138 : vector<32x1xf32> to vector<32x8xf32>
    %140 = arith.addf %137, %139 : vector<32x8xf32>
    %cst_52 = arith.constant 0.000000e+00 : f32
    %141 = vector.broadcast %cst_52 : f32 to vector<32x8xf32>
    %142 = arith.maximumf %140, %141 : vector<32x8xf32>
    %c0_53 = arith.constant 0 : index
    %c0_54 = arith.constant 0 : index
    %143 = vector.load %arg12[%c0_53, %c0_54] : memref<4x32xf32, #tpu.memory_space<vmem>>, vector<4x32xf32>
    %cst_55 = arith.constant dense<0.000000e+00> : vector<4x8xf32>
    %144 = tpu.matmul %143, %142, %cst_55 {dimension_numbers = #tpu.dot_dimension_numbers<[1], [0], [0], [1], [0, 0, 1, 1], [], []>} : vector<4x32xf32>, vector<32x8xf32>, vector<4x8xf32> -> vector<4x8xf32>
    %c0_56 = arith.constant 0 : index
    %c0_57 = arith.constant 0 : index
    %145 = vector.load %arg13[%c0_56, %c0_57] : memref<4x1xf32, #tpu.memory_space<vmem>>, vector<4x1xf32>
    %146 = vector.broadcast %145 : vector<4x1xf32> to vector<4x8xf32>
    %147 = arith.addf %144, %146 : vector<4x8xf32>
    %c0_58 = arith.constant 0 : index
    %c0_59 = arith.constant 0 : index
    %c0_60 = arith.constant 0 : index
    %148 = vector.load %arg14[%c0_58, %c0_59, %c0_60] : memref<1x4x8xf32, #tpu.memory_space<vmem>>, vector<1x4x8xf32>
    %149 = vector.shape_cast %148 : vector<1x4x8xf32> to vector<4x8xf32>
    %150 = vector.shape_cast %147 : vector<4x8xf32> to vector<1x4x8xf32>
    tpu.vector_store %arg14[%c0_58, %c0_59, %c0_60], %150 {strides = array<i32>} : memref<1x4x8xf32, #tpu.memory_space<vmem>>, vector<1x4x8xf32>,
    return
  }
  func.func @transform_0(%arg0: i32) -> (i32, i32, i32) {
    %c0_i32 = arith.constant 0 : i32
    %c0_i32_0 = arith.constant 0 : i32
    %c0_i32_1 = arith.constant 0 : i32
    return %arg0, %c0_i32, %c0_i32_0 : i32, i32, i32
  }
  func.func @transform_1(%arg0: i32) -> (i32, i32, i32) {
    %c0_i32 = arith.constant 0 : i32
    %c0_i32_0 = arith.constant 0 : i32
    %c0_i32_1 = arith.constant 0 : i32
    %c0_i32_2 = arith.constant 0 : i32
    return %c0_i32, %c0_i32_0, %c0_i32_1 : i32, i32, i32
  }
  func.func @transform_2(%arg0: i32) -> (i32, i32) {
    %c0_i32 = arith.constant 0 : i32
    %c0_i32_0 = arith.constant 0 : i32
    %c0_i32_1 = arith.constant 0 : i32
    return %c0_i32, %c0_i32_0 : i32, i32
  }
  func.func @transform_3(%arg0: i32) -> (i32, i32, i32) {
    %c0_i32 = arith.constant 0 : i32
    %c0_i32_0 = arith.constant 0 : i32
    %c0_i32_1 = arith.constant 0 : i32
    %c0_i32_2 = arith.constant 0 : i32
    return %c0_i32, %c0_i32_0, %c0_i32_1 : i32, i32, i32
  }
  func.func @transform_4(%arg0: i32) -> (i32, i32) {
    %c0_i32 = arith.constant 0 : i32
    %c0_i32_0 = arith.constant 0 : i32
    %c0_i32_1 = arith.constant 0 : i32
    return %c0_i32, %c0_i32_0 : i32, i32
  }
  func.func @transform_5(%arg0: i32) -> (i32, i32, i32) {
    %c0_i32 = arith.constant 0 : i32
    %c0_i32_0 = arith.constant 0 : i32
    %c0_i32_1 = arith.constant 0 : i32
    %c0_i32_2 = arith.constant 0 : i32
    return %c0_i32, %c0_i32_0, %c0_i32_1 : i32, i32, i32
  }
  func.func @transform_6(%arg0: i32) -> (i32, i32) {
    %c0_i32 = arith.constant 0 : i32
    %c0_i32_0 = arith.constant 0 : i32
    %c0_i32_1 = arith.constant 0 : i32
    return %c0_i32, %c0_i32_0 : i32, i32
  }
  func.func @transform_7(%arg0: i32) -> (i32, i32, i32) {
    %c0_i32 = arith.constant 0 : i32
    %c0_i32_0 = arith.constant 0 : i32
    %c0_i32_1 = arith.constant 0 : i32
    %c0_i32_2 = arith.constant 0 : i32
    return %c0_i32, %c0_i32_0, %c0_i32_1 : i32, i32, i32
  }
  func.func @transform_8(%arg0: i32) -> (i32, i32) {
    %c0_i32 = arith.constant 0 : i32
    %c0_i32_0 = arith.constant 0 : i32
    %c0_i32_1 = arith.constant 0 : i32
    return %c0_i32, %c0_i32_0 : i32, i32
  }
  func.func @transform_9(%arg0: i32) -> (i32, i32) {
    %c0_i32 = arith.constant 0 : i32
    %c0_i32_0 = arith.constant 0 : i32
    %c0_i32_1 = arith.constant 0 : i32
    return %c0_i32, %c0_i32_0 : i32, i32
  }
  func.func @transform_10(%arg0: i32) -> (i32, i32) {
    %c0_i32 = arith.constant 0 : i32
    %c0_i32_0 = arith.constant 0 : i32
    %c0_i32_1 = arith.constant 0 : i32
    return %c0_i32, %c0_i32_0 : i32, i32
  }
  func.func @transform_11(%arg0: i32) -> (i32, i32) {
    %c0_i32 = arith.constant 0 : i32
    %c0_i32_0 = arith.constant 0 : i32
    %c0_i32_1 = arith.constant 0 : i32
    return %c0_i32, %c0_i32_0 : i32, i32
  }
  func.func @transform_12(%arg0: i32) -> (i32, i32) {
    %c0_i32 = arith.constant 0 : i32
    %c0_i32_0 = arith.constant 0 : i32
    %c0_i32_1 = arith.constant 0 : i32
    return %c0_i32, %c0_i32_0 : i32, i32
  }
  func.func @transform_13(%arg0: i32) -> (i32, i32, i32) {
    %c0_i32 = arith.constant 0 : i32
    %c0_i32_0 = arith.constant 0 : i32
    %c0_i32_1 = arith.constant 0 : i32
    return %arg0, %c0_i32, %c0_i32_0 : i32, i32, i32
  }
}

</mosaic_0001>

<llo_original>
// kernel: tpu_custom_call.1
$region0: #{tpu_custom_call.1}
  #allocation0 [shape = 'u32[]', space=smem, size = 0x4, offset = 0x4, fixed_abs, tag = 'smem constant byte address 0x4 - core index']
  #allocation1 [shape = 'u32[144,128]{1,0:T(1,128)}', space=vmem, size = 0x12000, scoped, tag = 'internal scratch']
  %s0 = inlined_call_operand.vmem [shape: f32[1,256,16], index: 0, kind: input, shape index: {}]
  %s1 = inlined_call_operand.vmem [shape: f32[3,16,8], index: 1, kind: input, shape index: {}]
  %s2 = inlined_call_operand.vmem [shape: f32[1,8], index: 2, kind: input, shape index: {}]
  %s3 = inlined_call_operand.vmem [shape: f32[3,8,8], index: 3, kind: input, shape index: {}]
  %s4 = inlined_call_operand.vmem [shape: f32[1,8], index: 4, kind: input, shape index: {}]
  %s5 = inlined_call_operand.vmem [shape: f32[3,8,8], index: 5, kind: input, shape index: {}]
  %s6 = inlined_call_operand.vmem [shape: f32[1,8], index: 6, kind: input, shape index: {}]
  %s7 = inlined_call_operand.vmem [shape: f32[3,8,8], index: 7, kind: input, shape index: {}]
  %s8 = inlined_call_operand.vmem [shape: f32[1,8], index: 8, kind: input, shape index: {}]
  %s9 = inlined_call_operand.vmem [shape: f32[32,8], index: 9, kind: input, shape index: {}]
  %s10 = inlined_call_operand.vmem [shape: f32[32,1], index: 10, kind: input, shape index: {}]
  %s11 = inlined_call_operand.vmem [shape: f32[4,32], index: 11, kind: input, shape index: {}]
  %s12 = inlined_call_operand.vmem [shape: f32[4,1], index: 12, kind: input, shape index: {}]
  %s13 = inlined_call_operand.hbm [shape: f32[1,4,8], index: 13, kind: output, shape index: {}]
  %s14 = sld [smem:[#allocation0]]
  $region62: #{tpu_custom_call.1} parent=0
    _
  %s16 = ssub.s32 1, %s14
  %s17 = scalar_select 0, %s16, %s14
  $region1: #{tpu_custom_call.1} parent=0
    #allocation2 [shape = 'u8[2048]{0}', space=vmem, size = 0x800, scoped, tag = 'output window, operand 0, single buffered']
    #allocation3 [shape = 's32[1]{0}', space=sflag, size = 0x4, scoped, tag = 'scoped memory for tpu_custom_call.1']
    %18 = vsyncpa [#allocation3], 0
    // Predicated region
    $region2: #{tpu_custom_call.1} parent=1 // pred_check
      _
    $region3: #{tpu_custom_call.1} parent=1 // pred_check_branch
      %20 = sbr.rel (0) target = $region5
    $region4: #{tpu_custom_call.1} parent=1 // pred_region
      _
    $region5: #{tpu_custom_call.1} parent=1 // pred_fallthru
      _
    // Predicated region
    $region6: #{tpu_custom_call.1} parent=1 // pred_check
      _
    $region7: #{tpu_custom_call.1} parent=1 // pred_check_branch
      %22 = sbr.rel (0) target = $region9
    $region8: #{tpu_custom_call.1} parent=1 // pred_region
      _
    $region9: #{tpu_custom_call.1} parent=1 // pred_fallthru
      _
    // Predicated region
    $region10: #{tpu_custom_call.1} parent=1 // pred_check
      _
    $region11: #{tpu_custom_call.1} parent=1 // pred_check_branch
      %24 = sbr.rel (0) target = $region13
    $region12: #{tpu_custom_call.1} parent=1 // pred_region
      _
    $region13: #{tpu_custom_call.1} parent=1 // pred_fallthru
      _
    // Predicated region
    $region14: #{tpu_custom_call.1} parent=1 // pred_check
      _
    $region15: #{tpu_custom_call.1} parent=1 // pred_check_branch
      %26 = sbr.rel (0) target = $region17
    $region16: #{tpu_custom_call.1} parent=1 // pred_region
      _
    $region17: #{tpu_custom_call.1} parent=1 // pred_fallthru
      _
    // Predicated region
    $region18: #{tpu_custom_call.1} parent=1 // pred_check
      _
    $region19: #{tpu_custom_call.1} parent=1 // pred_check_branch
      %28 = sbr.rel (0) target = $region21
    $region20: #{tpu_custom_call.1} parent=1 // pred_region
      _
    $region21: #{tpu_custom_call.1} parent=1 // pred_fallthru
      _
    // Predicated region
    $region22: #{tpu_custom_call.1} parent=1 // pred_check
      _
    $region23: #{tpu_custom_call.1} parent=1 // pred_check_branch
      %30 = sbr.rel (0) target = $region25
    $region24: #{tpu_custom_call.1} parent=1 // pred_region
      _
    $region25: #{tpu_custom_call.1} parent=1 // pred_fallthru
      _
    // Predicated region
    $region26: #{tpu_custom_call.1} parent=1 // pred_check
      _
    $region27: #{tpu_custom_call.1} parent=1 // pred_check_branch
      %32 = sbr.rel (0) target = $region29
    $region28: #{tpu_custom_call.1} parent=1 // pred_region
      _
    $region29: #{tpu_custom_call.1} parent=1 // pred_fallthru
      _
    // Predicated region
    $region30: #{tpu_custom_call.1} parent=1 // pred_check
      _
    $region31: #{tpu_custom_call.1} parent=1 // pred_check_branch
      %34 = sbr.rel (0) target = $region33
    $region32: #{tpu_custom_call.1} parent=1 // pred_region
      _
    $region33: #{tpu_custom_call.1} parent=1 // pred_fallthru
      _
    // Predicated region
    $region34: #{tpu_custom_call.1} parent=1 // pred_check
      _
    $region35: #{tpu_custom_call.1} parent=1 // pred_check_branch
      %36 = sbr.rel (0) target = $region37
    $region36: #{tpu_custom_call.1} parent=1 // pred_region
      _
    $region37: #{tpu_custom_call.1} parent=1 // pred_fallthru
      _
    // Predicated region
    $region38: #{tpu_custom_call.1} parent=1 // pred_check
      _
    $region39: #{tpu_custom_call.1} parent=1 // pred_check_branch
      %38 = sbr.rel (0) target = $region41
    $region40: #{tpu_custom_call.1} parent=1 // pred_region
      _
    $region41: #{tpu_custom_call.1} parent=1 // pred_fallthru
      _
    // Predicated region
    $region42: #{tpu_custom_call.1} parent=1 // pred_check
      _
    $region43: #{tpu_custom_call.1} parent=1 // pred_check_branch
      %40 = sbr.rel (0) target = $region45
    $region44: #{tpu_custom_call.1} parent=1 // pred_region
      _
    $region45: #{tpu_custom_call.1} parent=1 // pred_fallthru
      _
    // Predicated region
    $region46: #{tpu_custom_call.1} parent=1 // pred_check
      _
    $region47: #{tpu_custom_call.1} parent=1 // pred_check_branch
      %42 = sbr.rel (0) target = $region49
    $region48: #{tpu_custom_call.1} parent=1 // pred_region
      _
    $region49: #{tpu_custom_call.1} parent=1 // pred_fallthru
      _
    // Predicated region
    $region50: #{tpu_custom_call.1} parent=1 // pred_check
      _
    $region51: #{tpu_custom_call.1} parent=1 // pred_check_branch
      %44 = sbr.rel (0) target = $region53
    $region52: #{tpu_custom_call.1} parent=1 // pred_region
      _
    $region53: #{tpu_custom_call.1} parent=1 // pred_fallthru
      _
    %v45 = vld [vmem:[%s0] sm:$0xff]
    %v46 = vld [vmem:[%s0 + $0x8] sm:$0xff]
    %v47 = vld [vmem:[%s0 + $0x10] sm:$0xff]
    %v48 = vld [vmem:[%s0 + $0x18] sm:$0xff]
    %v49 = vld [vmem:[%s0 + $0x20] sm:$0xff]
    %v50 = vld [vmem:[%s0 + $0x28] sm:$0xff]
    %v51 = vld [vmem:[%s0 + $0x30] sm:$0xff]
    %v52 = vld [vmem:[%s0 + $0x38] sm:$0xff]
    %v53 = vld [vmem:[%s0 + $0x40] sm:$0xff]
    %v54 = vld [vmem:[%s0 + $0x48] sm:$0xff]
    %v55 = vld [vmem:[%s0 + $0x50] sm:$0xff]
    %v56 = vld [vmem:[%s0 + $0x58] sm:$0xff]
    %v57 = vld [vmem:[%s0 + $0x60] sm:$0xff]
    %v58 = vld [vmem:[%s0 + $0x68] sm:$0xff]
    %v59 = vld [vmem:[%s0 + $0x70] sm:$0xff]
    %v60 = vld [vmem:[%s0 + $0x78] sm:$0xff]
    %v61 = vld [vmem:[%s0 + $0x80] sm:$0xff]
    %v62 = vld [vmem:[%s0 + $0x88] sm:$0xff]
    %v63 = vld [vmem:[%s0 + $0x90] sm:$0xff]
    %v64 = vld [vmem:[%s0 + $0x98] sm:$0xff]
    %v65 = vld [vmem:[%s0 + $0xa0] sm:$0xff]
    %v66 = vld [vmem:[%s0 + $0xa8] sm:$0xff]
    %v67 = vld [vmem:[%s0 + $0xb0] sm:$0xff]
    %v68 = vld [vmem:[%s0 + $0xb8] sm:$0xff]
    %v69 = vld [vmem:[%s0 + $0xc0] sm:$0xff]
    %v70 = vld [vmem:[%s0 + $0xc8] sm:$0xff]
    %v71 = vld [vmem:[%s0 + $0xd0] sm:$0xff]
    %v72 = vld [vmem:[%s0 + $0xd8] sm:$0xff]
    %v73 = vld [vmem:[%s0 + $0xe0] sm:$0xff]
    %v74 = vld [vmem:[%s0 + $0xe8] sm:$0xff]
    %v75 = vld [vmem:[%s0 + $0xf0] sm:$0xff]
    %v76 = vld [vmem:[%s0 + $0xf8] sm:$0xff]
    %v77 = vld [vmem:[%s1] sm:$0xff]
    %v78 = vld [vmem:[%s1 + $0x8] sm:$0xff]
    %v79 = vld [vmem:[%s1 + $0x10] sm:$0xff]
    %v80 = vld [vmem:[%s1 + $0x18] sm:$0xff]
    %v81 = vld [vmem:[%s1 + $0x20] sm:$0xff]
    %v82 = vld [vmem:[%s1 + $0x28] sm:$0xff]
    %vm83 = vcmask 130048
    %v85 = vsel %vm83, %v46, 0
    %v88 = vsel %vm83, %v47, 0
    %v91 = vsel %vm83, %v48, 0
    %v94 = vsel %vm83, %v49, 0
    %v97 = vsel %vm83, %v50, 0
    %v100 = vsel %vm83, %v51, 0
    %v103 = vsel %vm83, %v52, 0
    %v106 = vsel %vm83, %v53, 0
    %v109 = vsel %vm83, %v54, 0
    %v112 = vsel %vm83, %v55, 0
    %v115 = vsel %vm83, %v56, 0
    %v118 = vsel %vm83, %v57, 0
    %v121 = vsel %vm83, %v58, 0
    %v124 = vsel %vm83, %v59, 0
    %v127 = vsel %vm83, %v60, 0
    %v130 = vsel %vm83, %v61, 0
    %v133 = vsel %vm83, %v62, 0
    %v136 = vsel %vm83, %v63, 0
    %v139 = vsel %vm83, %v64, 0
    %v142 = vsel %vm83, %v65, 0
    %v145 = vsel %vm83, %v66, 0
    %v148 = vsel %vm83, %v67, 0
    %v151 = vsel %vm83, %v68, 0
    %v154 = vsel %vm83, %v69, 0
    %v157 = vsel %vm83, %v70, 0
    %v160 = vsel %vm83, %v71, 0
    %v163 = vsel %vm83, %v72, 0
    %v166 = vsel %vm83, %v73, 0
    %v169 = vsel %vm83, %v74, 0
    %v172 = vsel %vm83, %v75, 0
    %174 = vmatprep.subr.mxu0 0.0
    %175 = vmatpush1.msra.mxu0 0.0
    %176 = vmatprep.subr.mxu0 0.0
    %177 = vmatpush1.msra.mxu0 0.0
    %178 = vmatprep.subr.mxu0 0.0
    %179 = vmatpush1.msra.mxu0 0.0
    %180 = vmatprep.subr.mxu0 0.0
    %181 = vmatpush1.msra.mxu0 0.0
    %182 = vmatprep.subr.mxu0 0.0
    %183 = vmatpush1.msra.mxu0 0.0
    %184 = vmatprep.subr.mxu0 0.0
    %185 = vmatpush1.msra.mxu0 0.0
    %186 = vmatprep.subr.mxu0 0.0
    %187 = vmatpush1.msra.mxu0 0.0
    %188 = vmatprep.subr.mxu0 0.0
    %189 = vmatpush1.msra.mxu0 0.0
    %190 = vmatprep.subr.mxu0 0.0
    %191 = vmatpush1.msra.mxu0 0.0
    %192 = vmatprep.subr.mxu0 0.0
    %193 = vmatpush1.msra.mxu0 0.0
    %194 = vmatprep.subr.mxu0 0.0
    %195 = vmatpush1.msra.mxu0 0.0
    %196 = vmatprep.subr.mxu0 0.0
    %197 = vmatpush1.msra.mxu0 0.0
    %198 = vmatprep.subr.mxu0 0.0
    %199 = vmatpush1.msra.mxu0 0.0
    %200 = vmatprep.subr.mxu0 0.0
    %201 = vmatpush1.msra.mxu0 0.0
    %202 = vmatprep.subr.mxu0 0.0
    %203 = vmatpush1.msra.mxu0 %v80
    %204 = vmatprep.subr.mxu0 0.0
    %205 = vmatpush1.msra.mxu0 %v79
    %206 = vmatprep.subr.mxu0 0.0
    %207 = vmatpush2.msra.mxu0 0.0
    %208 = vmatprep.subr.mxu0 0.0
    %209 = vmatpush2.msra.mxu0 0.0
    %210 = vmatprep.subr.mxu0 0.0
    %211 = vmatpush2.msra.mxu0 0.0
    %212 = vmatprep.subr.mxu0 0.0
    %213 = vmatpush2.msra.mxu0 0.0
    %214 = vmatprep.subr.mxu0 0.0
    %215 = vmatpush2.msra.mxu0 0.0
    %216 = vmatprep.subr.mxu0 0.0
    %217 = vmatpush2.msra.mxu0 0.0
    %218 = vmatprep.subr.mxu0 0.0
    %219 = vmatpush2.msra.mxu0 0.0
    %220 = vmatprep.subr.mxu0 0.0
    %221 = vmatpush2.msra.mxu0 0.0
    %222 = vmatprep.subr.mxu0 0.0
    %223 = vmatpush2.msra.mxu0 0.0
    %224 = vmatprep.subr.mxu0 0.0
    %225 = vmatpush2.msra.mxu0 0.0
    %226 = vmatprep.subr.mxu0 0.0
    %227 = vmatpush2.msra.mxu0 0.0
    %228 = vmatprep.subr.mxu0 0.0
    %229 = vmatpush2.msra.mxu0 0.0
    %230 = vmatprep.subr.mxu0 0.0
    %231 = vmatpush2.msra.mxu0 0.0
    %232 = vmatprep.subr.mxu0 0.0
    %233 = vmatpush2.msra.mxu0 0.0
    %234 = vmatprep.subr.mxu0 0.0
    %235 = vmatpush2.msra.mxu0 0.0
    %236 = vmatprep.subr.mxu0 0.0
    %237 = vmatpush2.msra.mxu0 0.0
    %238 = vmatprep.mubr.f32.mxu0 0.0
    %239 = vmatmul.mubr.f32.gmra.mxu0 %v85
    %v240 = vpop.f32.mrf.mxu0
    %v241 = vadd.f32 0.0, %v240
    %v242 = vpop.f32.mrf.mxu0
    %243 = vmatprep.mubr.f32.mxu0 0.0
    %244 = vmatmul.mubr.f32.gmra.mxu0 %v88
    %v245 = vpop.f32.mrf.mxu0
    %v246 = vadd.f32 0.0, %v245
    %v247 = vpop.f32.mrf.mxu0
    %248 = vmatprep.mubr.f32.mxu0 0.0
    %249 = vmatmul.mubr.f32.gmra.mxu0 %v91
    %v250 = vpop.f32.mrf.mxu0
    %v251 = vadd.f32 0.0, %v250
    %v252 = vpop.f32.mrf.mxu0
    %253 = vmatprep.mubr.f32.mxu0 0.0
    %254 = vmatmul.mubr.f32.gmra.mxu0 %v94
    %v255 = vpop.f32.mrf.mxu0
    %v256 = vadd.f32 0.0, %v255
    %v257 = vpop.f32.mrf.mxu0
    %258 = vmatprep.mubr.f32.mxu0 0.0
    %259 = vmatmul.mubr.f32.gmra.mxu0 %v97
    %v260 = vpop.f32.mrf.mxu0
    %v261 = vadd.f32 0.0, %v260
    %v262 = vpop.f32.mrf.mxu0
    %263 = vmatprep.mubr.f32.mxu0 0.0
    %264 = vmatmul.mubr.f32.gmra.mxu0 %v100
    %v265 = vpop.f32.mrf.mxu0
    %v266 = vadd.f32 0.0, %v265
    %v267 = vpop.f32.mrf.mxu0
    %268 = vmatprep.mubr.f32.mxu0 0.0
    %269 = vmatmul.mubr.f32.gmra.mxu0 %v103
    %v270 = vpop.f32.mrf.mxu0
    %v271 = vadd.f32 0.0, %v270
    %v272 = vpop.f32.mrf.mxu0
    %273 = vmatprep.mubr.f32.mxu0 0.0
    %274 = vmatmul.mubr.f32.gmra.mxu0 %v106
    %v275 = vpop.f32.mrf.mxu0
    %v276 = vadd.f32 0.0, %v275
    %v277 = vpop.f32.mrf.mxu0
    %278 = vmatprep.mubr.f32.mxu0 0.0
    %279 = vmatmul.mubr.f32.gmra.mxu0 %v109
    %v280 = vpop.f32.mrf.mxu0
    %v281 = vadd.f32 0.0, %v280
    %v282 = vpop.f32.mrf.mxu0
    %283 = vmatprep.mubr.f32.mxu0 0.0
    %284 = vmatmul.mubr.f32.gmra.mxu0 %v112
    %v285 = vpop.f32.mrf.mxu0
    %v286 = vadd.f32 0.0, %v285
    %v287 = vpop.f32.mrf.mxu0
    %288 = vmatprep.mubr.f32.mxu0 0.0
    %289 = vmatmul.mubr.f32.gmra.mxu0 %v115
    %v290 = vpop.f32.mrf.mxu0
    %v291 = vadd.f32 0.0, %v290
    %v292 = vpop.f32.mrf.mxu0
    %293 = vmatprep.mubr.f32.mxu0 0.0
    %294 = vmatmul.mubr.f32.gmra.mxu0 %v118
    %v295 = vpop.f32.mrf.mxu0
    %v296 = vadd.f32 0.0, %v295
    %v297 = vpop.f32.mrf.mxu0
    %298 = vmatprep.mubr.f32.mxu0 0.0
    %299 = vmatmul.mubr.f32.gmra.mxu0 %v121
    %v300 = vpop.f32.mrf.mxu0
    %v301 = vadd.f32 0.0, %v300
    %v302 = vpop.f32.mrf.mxu0
    %303 = vmatprep.mubr.f32.mxu0 0.0
    %304 = vmatmul.mubr.f32.gmra.mxu0 %v124
    %v305 = vpop.f32.mrf.mxu0
    %v306 = vadd.f32 0.0, %v305
    %v307 = vpop.f32.mrf.mxu0
    %308 = vmatprep.mubr.f32.mxu0 0.0
    %309 = vmatmul.mubr.f32.gmra.mxu0 %v127
    %v310 = vpop.f32.mrf.mxu0
    %v311 = vadd.f32 0.0, %v310
    %v312 = vpop.f32.mrf.mxu0
    %313 = vmatprep.mubr.f32.mxu0 0.0
    %314 = vmatmul.mubr.f32.gmra.mxu0 %v130
    %v315 = vpop.f32.mrf.mxu0
    %v316 = vadd.f32 0.0, %v315
    %v317 = vpop.f32.mrf.mxu0
    %318 = vmatprep.mubr.f32.mxu0 0.0
    %319 = vmatmul.mubr.f32.gmra.mxu0 %v133
    %v320 = vpop.f32.mrf.mxu0
    %v321 = vadd.f32 0.0, %v320
    %v322 = vpop.f32.mrf.mxu0
    %323 = vmatprep.mubr.f32.mxu0 0.0
    %324 = vmatmul.mubr.f32.gmra.mxu0 %v136
    %v325 = vpop.f32.mrf.mxu0
    %v326 = vadd.f32 0.0, %v325
    %v327 = vpop.f32.mrf.mxu0
    %328 = vmatprep.mubr.f32.mxu0 0.0
    %329 = vmatmul.mubr.f32.gmra.mxu0 %v139
    %v330 = vpop.f32.mrf.mxu0
    %v331 = vadd.f32 0.0, %v330
    %v332 = vpop.f32.mrf.mxu0
    %333 = vmatprep.mubr.f32.mxu0 0.0
    %334 = vmatmul.mubr.f32.gmra.mxu0 %v142
    %v335 = vpop.f32.mrf.mxu0
    %v336 = vadd.f32 0.0, %v335
    %v337 = vpop.f32.mrf.mxu0
    %338 = vmatprep.mubr.f32.mxu0 0.0
    %339 = vmatmul.mubr.f32.gmra.mxu0 %v145
    %v340 = vpop.f32.mrf.mxu0
    %v341 = vadd.f32 0.0, %v340
    %v342 = vpop.f32.mrf.mxu0
    %343 = vmatprep.mubr.f32.mxu0 0.0
    %344 = vmatmul.mubr.f32.gmra.mxu0 %v148
    %v345 = vpop.f32.mrf.mxu0
    %v346 = vadd.f32 0.0, %v345
    %v347 = vpop.f32.mrf.mxu0
    %348 = vmatprep.mubr.f32.mxu0 0.0
    %349 = vmatmul.mubr.f32.gmra.mxu0 %v151
    %v350 = vpop.f32.mrf.mxu0
    %v351 = vadd.f32 0.0, %v350
    %v352 = vpop.f32.mrf.mxu0
    %353 = vmatprep.mubr.f32.mxu0 0.0
    %354 = vmatmul.mubr.f32.gmra.mxu0 %v154
    %v355 = vpop.f32.mrf.mxu0
    %v356 = vadd.f32 0.0, %v355
    %v357 = vpop.f32.mrf.mxu0
    %358 = vmatprep.mubr.f32.mxu0 0.0
    %359 = vmatmul.mubr.f32.gmra.mxu0 %v157
    %v360 = vpop.f32.mrf.mxu0
    %v361 = vadd.f32 0.0, %v360
    %v362 = vpop.f32.mrf.mxu0
    %363 = vmatprep.mubr.f32.mxu0 0.0
    %364 = vmatmul.mubr.f32.gmra.mxu0 %v160
    %v365 = vpop.f32.mrf.mxu0
    %v366 = vadd.f32 0.0, %v365
    %v367 = vpop.f32.mrf.mxu0
    %368 = vmatprep.mubr.f32.mxu0 0.0
    %369 = vmatmul.mubr.f32.gmra.mxu0 %v163
    %v370 = vpop.f32.mrf.mxu0
    %v371 = vadd.f32 0.0, %v370
    %v372 = vpop.f32.mrf.mxu0
    %373 = vmatprep.mubr.f32.mxu0 0.0
    %374 = vmatmul.mubr.f32.gmra.mxu0 %v166
    %v375 = vpop.f32.mrf.mxu0
    %v376 = vadd.f32 0.0, %v375
    %v377 = vpop.f32.mrf.mxu0
    %378 = vmatprep.mubr.f32.mxu0 0.0
    %379 = vmatmul.mubr.f32.gmra.mxu0 %v169
    %v380 = vpop.f32.mrf.mxu0
    %v381 = vadd.f32 0.0, %v380
    %v382 = vpop.f32.mrf.mxu0
    %383 = vmatprep.mubr.f32.mxu0 0.0
    %384 = vmatmul.mubr.f32.gmra.mxu0 %v172
    %v385 = vpop.f32.mrf.mxu0
    %v386 = vpop.f32.mrf.mxu0
    %387 = vdwg.mxu0
    %v389 = vsel %vm83, %v45, 0
    %391 = vmatprep.subr.mxu0 0.0
    %392 = vmatpush1.msra.mxu0 0.0
    %393 = vmatprep.subr.mxu0 0.0
    %394 = vmatpush1.msra.mxu0 0.0
    %395 = vmatprep.subr.mxu0 0.0
    %396 = vmatpush1.msra.mxu0 0.0
    %397 = vmatprep.subr.mxu0 0.0
    %398 = vmatpush1.msra.mxu0 0.0
    %399 = vmatprep.subr.mxu0 0.0
    %400 = vmatpush1.msra.mxu0 0.0
    %401 = vmatprep.subr.mxu0 0.0
    %402 = vmatpush1.msra.mxu0 0.0
    %403 = vmatprep.subr.mxu0 0.0
    %404 = vmatpush1.msra.mxu0 0.0
    %405 = vmatprep.subr.mxu0 0.0
    %406 = vmatpush1.msra.mxu0 0.0
    %407 = vmatprep.subr.mxu0 0.0
    %408 = vmatpush1.msra.mxu0 0.0
    %409 = vmatprep.subr.mxu0 0.0
    %410 = vmatpush1.msra.mxu0 0.0
    %411 = vmatprep.subr.mxu0 0.0
    %412 = vmatpush1.msra.mxu0 0.0
    %413 = vmatprep.subr.mxu0 0.0
    %414 = vmatpush1.msra.mxu0 0.0
    %415 = vmatprep.subr.mxu0 0.0
    %416 = vmatpush1.msra.mxu0 0.0
    %417 = vmatprep.subr.mxu0 0.0
    %418 = vmatpush1.msra.mxu0 0.0
    %419 = vmatprep.subr.mxu0 0.0
    %420 = vmatpush1.msra.mxu0 %v78
    %421 = vmatprep.subr.mxu0 0.0
    %422 = vmatpush1.msra.mxu0 %v77
    %423 = vmatprep.subr.mxu0 0.0
    %424 = vmatpush2.msra.mxu0 0.0
    %425 = vmatprep.subr.mxu0 0.0
    %426 = vmatpush2.msra.mxu0 0.0
    %427 = vmatprep.subr.mxu0 0.0
    %428 = vmatpush2.msra.mxu0 0.0
    %429 = vmatprep.subr.mxu0 0.0
    %430 = vmatpush2.msra.mxu0 0.0
    %431 = vmatprep.subr.mxu0 0.0
    %432 = vmatpush2.msra.mxu0 0.0
    %433 = vmatprep.subr.mxu0 0.0
    %434 = vmatpush2.msra.mxu0 0.0
    %435 = vmatprep.subr.mxu0 0.0
    %436 = vmatpush2.msra.mxu0 0.0
    %437 = vmatprep.subr.mxu0 0.0
    %438 = vmatpush2.msra.mxu0 0.0
    %439 = vmatprep.subr.mxu0 0.0
    %440 = vmatpush2.msra.mxu0 0.0
    %441 = vmatprep.subr.mxu0 0.0
    %442 = vmatpush2.msra.mxu0 0.0
    %443 = vmatprep.subr.mxu0 0.0
    %444 = vmatpush2.msra.mxu0 0.0
    %445 = vmatprep.subr.mxu0 0.0
    %446 = vmatpush2.msra.mxu0 0.0
    %447 = vmatprep.subr.mxu0 0.0
    %448 = vmatpush2.msra.mxu0 0.0
    %449 = vmatprep.subr.mxu0 0.0
    %450 = vmatpush2.msra.mxu0 0.0
    %451 = vmatprep.subr.mxu0 0.0
    %452 = vmatpush2.msra.mxu0 0.0
    %453 = vmatprep.subr.mxu0 0.0
    %454 = vmatpush2.msra.mxu0 0.0
    %455 = vmatprep.mubr.f32.mxu0 0.0
    %456 = vmatmul.mubr.f32.gmra.mxu0 %v389
    %v457 = vpop.f32.mrf.mxu0
    %v458 = vadd.f32 %v241, %v457
    %v459 = vpop.f32.mrf.mxu0
    %460 = vmatprep.mubr.f32.mxu0 0.0
    %461 = vmatmul.mubr.f32.gmra.mxu0 %v85
    %v462 = vpop.f32.mrf.mxu0
    %v463 = vadd.f32 %v246, %v462
    %v464 = vpop.f32.mrf.mxu0
    %465 = vmatprep.mubr.f32.mxu0 0.0
    %466 = vmatmul.mubr.f32.gmra.mxu0 %v88
    %v467 = vpop.f32.mrf.mxu0
    %v468 = vadd.f32 %v251, %v467
    %v469 = vpop.f32.mrf.mxu0
    %470 = vmatprep.mubr.f32.mxu0 0.0
    %471 = vmatmul.mubr.f32.gmra.mxu0 %v91
    %v472 = vpop.f32.mrf.mxu0
    %v473 = vadd.f32 %v256, %v472
    %v474 = vpop.f32.mrf.mxu0
    %475 = vmatprep.mubr.f32.mxu0 0.0
    %476 = vmatmul.mubr.f32.gmra.mxu0 %v94
    %v477 = vpop.f32.mrf.mxu0
    %v478 = vadd.f32 %v261, %v477
    %v479 = vpop.f32.mrf.mxu0
    %480 = vmatprep.mubr.f32.mxu0 0.0
    %481 = vmatmul.mubr.f32.gmra.mxu0 %v97
    %v482 = vpop.f32.mrf.mxu0
    %v483 = vadd.f32 %v266, %v482
    %v484 = vpop.f32.mrf.mxu0
    %485 = vmatprep.mubr.f32.mxu0 0.0
    %486 = vmatmul.mubr.f32.gmra.mxu0 %v100
    %v487 = vpop.f32.mrf.mxu0
    %v488 = vadd.f32 %v271, %v487
    %v489 = vpop.f32.mrf.mxu0
    %490 = vmatprep.mubr.f32.mxu0 0.0
    %491 = vmatmul.mubr.f32.gmra.mxu0 %v103
    %v492 = vpop.f32.mrf.mxu0
    %v493 = vadd.f32 %v276, %v492
    %v494 = vpop.f32.mrf.mxu0
    %495 = vmatprep.mubr.f32.mxu0 0.0
    %496 = vmatmul.mubr.f32.gmra.mxu0 %v106
    %v497 = vpop.f32.mrf.mxu0
    %v498 = vadd.f32 %v281, %v497
    %v499 = vpop.f32.mrf.mxu0
    %500 = vmatprep.mubr.f32.mxu0 0.0
    %501 = vmatmul.mubr.f32.gmra.mxu0 %v109
    %v502 = vpop.f32.mrf.mxu0
    %v503 = vadd.f32 %v286, %v502
    %v504 = vpop.f32.mrf.mxu0
    %505 = vmatprep.mubr.f32.mxu0 0.0
    %506 = vmatmul.mubr.f32.gmra.mxu0 %v112
    %v507 = vpop.f32.mrf.mxu0
    %v508 = vadd.f32 %v291, %v507
    %v509 = vpop.f32.mrf.mxu0
    %510 = vmatprep.mubr.f32.mxu0 0.0
    %511 = vmatmul.mubr.f32.gmra.mxu0 %v115
    %v512 = vpop.f32.mrf.mxu0
    %v513 = vadd.f32 %v296, %v512
    %v514 = vpop.f32.mrf.mxu0
    %515 = vmatprep.mubr.f32.mxu0 0.0
    %516 = vmatmul.mubr.f32.gmra.mxu0 %v118
    %v517 = vpop.f32.mrf.mxu0
    %v518 = vadd.f32 %v301, %v517
    %v519 = vpop.f32.mrf.mxu0
    %520 = vmatprep.mubr.f32.mxu0 0.0
    %521 = vmatmul.mubr.f32.gmra.mxu0 %v121
    %v522 = vpop.f32.mrf.mxu0
    %v523 = vadd.f32 %v306, %v522
    %v524 = vpop.f32.mrf.mxu0
    %525 = vmatprep.mubr.f32.mxu0 0.0
    %526 = vmatmul.mubr.f32.gmra.mxu0 %v124
    %v527 = vpop.f32.mrf.mxu0
    %v528 = vadd.f32 %v311, %v527
    %v529 = vpop.f32.mrf.mxu0
    %530 = vmatprep.mubr.f32.mxu0 0.0
    %531 = vmatmul.mubr.f32.gmra.mxu0 %v127
    %v532 = vpop.f32.mrf.mxu0
    %v533 = vadd.f32 %v316, %v532
    %v534 = vpop.f32.mrf.mxu0
    %535 = vmatprep.mubr.f32.mxu0 0.0
    %536 = vmatmul.mubr.f32.gmra.mxu0 %v130
    %v537 = vpop.f32.mrf.mxu0
    %v538 = vadd.f32 %v321, %v537
    %v539 = vpop.f32.mrf.mxu0
    %540 = vmatprep.mubr.f32.mxu0 0.0
    %541 = vmatmul.mubr.f32.gmra.mxu0 %v133
    %v542 = vpop.f32.mrf.mxu0
    %v543 = vadd.f32 %v326, %v542
    %v544 = vpop.f32.mrf.mxu0
    %545 = vmatprep.mubr.f32.mxu0 0.0
    %546 = vmatmul.mubr.f32.gmra.mxu0 %v136
    %v547 = vpop.f32.mrf.mxu0
    %v548 = vadd.f32 %v331, %v547
    %v549 = vpop.f32.mrf.mxu0
    %550 = vmatprep.mubr.f32.mxu0 0.0
    %551 = vmatmul.mubr.f32.gmra.mxu0 %v139
    %v552 = vpop.f32.mrf.mxu0
    %v553 = vadd.f32 %v336, %v552
    %v554 = vpop.f32.mrf.mxu0
    %555 = vmatprep.mubr.f32.mxu0 0.0
    %556 = vmatmul.mubr.f32.gmra.mxu0 %v142
    %v557 = vpop.f32.mrf.mxu0
    %v558 = vadd.f32 %v341, %v557
    %v559 = vpop.f32.mrf.mxu0
    %560 = vmatprep.mubr.f32.mxu0 0.0
    %561 = vmatmul.mubr.f32.gmra.mxu0 %v145
    %v562 = vpop.f32.mrf.mxu0
    %v563 = vadd.f32 %v346, %v562
    %v564 = vpop.f32.mrf.mxu0
    %565 = vmatprep.mubr.f32.mxu0 0.0
    %566 = vmatmul.mubr.f32.gmra.mxu0 %v148
    %v567 = vpop.f32.mrf.mxu0
    %v568 = vadd.f32 %v351, %v567
    %v569 = vpop.f32.mrf.mxu0
    %570 = vmatprep.mubr.f32.mxu0 0.0
    %571 = vmatmul.mubr.f32.gmra.mxu0 %v151
    %v572 = vpop.f32.mrf.mxu0
    %v573 = vadd.f32 %v356, %v572
    %v574 = vpop.f32.mrf.mxu0
    %575 = vmatprep.mubr.f32.mxu0 0.0
    %576 = vmatmul.mubr.f32.gmra.mxu0 %v154
    %v577 = vpop.f32.mrf.mxu0
    %v578 = vadd.f32 %v361, %v577
    %v579 = vpop.f32.mrf.mxu0
    %580 = vmatprep.mubr.f32.mxu0 0.0
    %581 = vmatmul.mubr.f32.gmra.mxu0 %v157
    %v582 = vpop.f32.mrf.mxu0
    %v583 = vadd.f32 %v366, %v582
    %v584 = vpop.f32.mrf.mxu0
    %585 = vmatprep.mubr.f32.mxu0 0.0
    %586 = vmatmul.mubr.f32.gmra.mxu0 %v160
    %v587 = vpop.f32.mrf.mxu0
    %v588 = vadd.f32 %v371, %v587
    %v589 = vpop.f32.mrf.mxu0
    %590 = vmatprep.mubr.f32.mxu0 0.0
    %591 = vmatmul.mubr.f32.gmra.mxu0 %v163
    %v592 = vpop.f32.mrf.mxu0
    %v593 = vadd.f32 %v376, %v592
    %v594 = vpop.f32.mrf.mxu0
    %595 = vmatprep.mubr.f32.mxu0 0.0
    %596 = vmatmul.mubr.f32.gmra.mxu0 %v166
    %v597 = vpop.f32.mrf.mxu0
    %v598 = vadd.f32 %v381, %v597
    %v599 = vpop.f32.mrf.mxu0
    %600 = vmatprep.mubr.f32.mxu0 0.0
    %601 = vmatmul.mubr.f32.gmra.mxu0 %v169
    %v602 = vpop.f32.mrf.mxu0
    %v603 = vpop.f32.mrf.mxu0
    %604 = vdwg.mxu0
    %v606 = vsel %vm83, %v76, 0
    %608 = vmatprep.subr.mxu0 0.0
    %609 = vmatpush1.msra.mxu0 0.0
    %610 = vmatprep.subr.mxu0 0.0
    %611 = vmatpush1.msra.mxu0 0.0
    %612 = vmatprep.subr.mxu0 0.0
    %613 = vmatpush1.msra.mxu0 0.0
    %614 = vmatprep.subr.mxu0 0.0
    %615 = vmatpush1.msra.mxu0 0.0
    %616 = vmatprep.subr.mxu0 0.0
    %617 = vmatpush1.msra.mxu0 0.0
    %618 = vmatprep.subr.mxu0 0.0
    %619 = vmatpush1.msra.mxu0 0.0
    %620 = vmatprep.subr.mxu0 0.0
    %621 = vmatpush1.msra.mxu0 0.0
    %622 = vmatprep.subr.mxu0 0.0
    %623 = vmatpush1.msra.mxu0 0.0
    %624 = vmatprep.subr.mxu0 0.0
    %625 = vmatpush1.msra.mxu0 0.0
    %626 = vmatprep.subr.mxu0 0.0
    %627 = vmatpush1.msra.mxu0 0.0
    %628 = vmatprep.subr.mxu0 0.0
    %629 = vmatpush1.msra.mxu0 0.0
    %630 = vmatprep.subr.mxu0 0.0
    %631 = vmatpush1.msra.mxu0 0.0
    %632 = vmatprep.subr.mxu0 0.0
    %633 = vmatpush1.msra.mxu0 0.0
    %634 = vmatprep.subr.mxu0 0.0
    %635 = vmatpush1.msra.mxu0 0.0
    %636 = vmatprep.subr.mxu0 0.0
    %637 = vmatpush1.msra.mxu0 %v82
    %638 = vmatprep.subr.mxu0 0.0
    %639 = vmatpush1.msra.mxu0 %v81
    %640 = vmatprep.subr.mxu0 0.0
    %641 = vmatpush2.msra.mxu0 0.0
    %642 = vmatprep.subr.mxu0 0.0
    %643 = vmatpush2.msra.mxu0 0.0
    %644 = vmatprep.subr.mxu0 0.0
    %645 = vmatpush2.msra.mxu0 0.0
    %646 = vmatprep.subr.mxu0 0.0
    %647 = vmatpush2.msra.mxu0 0.0
    %648 = vmatprep.subr.mxu0 0.0
    %649 = vmatpush2.msra.mxu0 0.0
    %650 = vmatprep.subr.mxu0 0.0
    %651 = vmatpush2.msra.mxu0 0.0
    %652 = vmatprep.subr.mxu0 0.0
    %653 = vmatpush2.msra.mxu0 0.0
    %654 = vmatprep.subr.mxu0 0.0
    %655 = vmatpush2.msra.mxu0 0.0
    %656 = vmatprep.subr.mxu0 0.0
    %657 = vmatpush2.msra.mxu0 0.0
    %658 = vmatprep.subr.mxu0 0.0
    %659 = vmatpush2.msra.mxu0 0.0
    %660 = vmatprep.subr.mxu0 0.0
    %661 = vmatpush2.msra.mxu0 0.0
    %662 = vmatprep.subr.mxu0 0.0
    %663 = vmatpush2.msra.mxu0 0.0
    %664 = vmatprep.subr.mxu0 0.0
    %665 = vmatpush2.msra.mxu0 0.0
    %666 = vmatprep.subr.mxu0 0.0
    %667 = vmatpush2.msra.mxu0 0.0
    %668 = vmatprep.subr.mxu0 0.0
    %669 = vmatpush2.msra.mxu0 0.0
    %670 = vmatprep.subr.mxu0 0.0
    %671 = vmatpush2.msra.mxu0 0.0
    %672 = vmatprep.mubr.f32.mxu0 0.0
    %673 = vmatmul.mubr.f32.gmra.mxu0 %v88
    %v674 = vpop.f32.mrf.mxu0
    %v675 = vadd.f32 0.0, %v674
    %v676 = vpop.f32.mrf.mxu0
    %677 = vmatprep.mubr.f32.mxu0 0.0
    %678 = vmatmul.mubr.f32.gmra.mxu0 %v91
    %v679 = vpop.f32.mrf.mxu0
    %v680 = vadd.f32 0.0, %v679
    %v681 = vpop.f32.mrf.mxu0
    %682 = vmatprep.mubr.f32.mxu0 0.0
    %683 = vmatmul.mubr.f32.gmra.mxu0 %v94
    %v684 = vpop.f32.mrf.mxu0
    %v685 = vadd.f32 0.0, %v684
    %v686 = vpop.f32.mrf.mxu0
    %687 = vmatprep.mubr.f32.mxu0 0.0
    %688 = vmatmul.mubr.f32.gmra.mxu0 %v97
    %v689 = vpop.f32.mrf.mxu0
    %v690 = vadd.f32 0.0, %v689
    %v691 = vpop.f32.mrf.mxu0
    %692 = vmatprep.mubr.f32.mxu0 0.0
    %693 = vmatmul.mubr.f32.gmra.mxu0 %v100
    %v694 = vpop.f32.mrf.mxu0
    %v695 = vadd.f32 0.0, %v694
    %v696 = vpop.f32.mrf.mxu0
    %697 = vmatprep.mubr.f32.mxu0 0.0
    %698 = vmatmul.mubr.f32.gmra.mxu0 %v103
    %v699 = vpop.f32.mrf.mxu0
    %v700 = vadd.f32 0.0, %v699
    %v701 = vpop.f32.mrf.mxu0
    %702 = vmatprep.mubr.f32.mxu0 0.0
    %703 = vmatmul.mubr.f32.gmra.mxu0 %v106
    %v704 = vpop.f32.mrf.mxu0
    %v705 = vadd.f32 0.0, %v704
    %v706 = vpop.f32.mrf.mxu0
    %707 = vmatprep.mubr.f32.mxu0 0.0
    %708 = vmatmul.mubr.f32.gmra.mxu0 %v109
    %v709 = vpop.f32.mrf.mxu0
    %v710 = vadd.f32 0.0, %v709
    %v711 = vpop.f32.mrf.mxu0
    %712 = vmatprep.mubr.f32.mxu0 0.0
    %713 = vmatmul.mubr.f32.gmra.mxu0 %v112
    %v714 = vpop.f32.mrf.mxu0
    %v715 = vadd.f32 0.0, %v714
    %v716 = vpop.f32.mrf.mxu0
    %717 = vmatprep.mubr.f32.mxu0 0.0
    %718 = vmatmul.mubr.f32.gmra.mxu0 %v115
    %v719 = vpop.f32.mrf.mxu0
    %v720 = vadd.f32 0.0, %v719
    %v721 = vpop.f32.mrf.mxu0
    %722 = vmatprep.mubr.f32.mxu0 0.0
    %723 = vmatmul.mubr.f32.gmra.mxu0 %v118
    %v724 = vpop.f32.mrf.mxu0
    %v725 = vadd.f32 0.0, %v724
    %v726 = vpop.f32.mrf.mxu0
    %727 = vmatprep.mubr.f32.mxu0 0.0
    %728 = vmatmul.mubr.f32.gmra.mxu0 %v121
    %v729 = vpop.f32.mrf.mxu0
    %v730 = vadd.f32 0.0, %v729
    %v731 = vpop.f32.mrf.mxu0
    %732 = vmatprep.mubr.f32.mxu0 0.0
    %733 = vmatmul.mubr.f32.gmra.mxu0 %v124
    %v734 = vpop.f32.mrf.mxu0
    %v735 = vadd.f32 0.0, %v734
    %v736 = vpop.f32.mrf.mxu0
    %737 = vmatprep.mubr.f32.mxu0 0.0
    %738 = vmatmul.mubr.f32.gmra.mxu0 %v127
    %v739 = vpop.f32.mrf.mxu0
    %v740 = vadd.f32 0.0, %v739
    %v741 = vpop.f32.mrf.mxu0
    %742 = vmatprep.mubr.f32.mxu0 0.0
    %743 = vmatmul.mubr.f32.gmra.mxu0 %v130
    %v744 = vpop.f32.mrf.mxu0
    %v745 = vadd.f32 0.0, %v744
    %v746 = vpop.f32.mrf.mxu0
    %747 = vmatprep.mubr.f32.mxu0 0.0
    %748 = vmatmul.mubr.f32.gmra.mxu0 %v133
    %v749 = vpop.f32.mrf.mxu0
    %v750 = vadd.f32 0.0, %v749
    %v751 = vpop.f32.mrf.mxu0
    %752 = vmatprep.mubr.f32.mxu0 0.0
    %753 = vmatmul.mubr.f32.gmra.mxu0 %v136
    %v754 = vpop.f32.mrf.mxu0
    %v755 = vadd.f32 0.0, %v754
    %v756 = vpop.f32.mrf.mxu0
    %757 = vmatprep.mubr.f32.mxu0 0.0
    %758 = vmatmul.mubr.f32.gmra.mxu0 %v139
    %v759 = vpop.f32.mrf.mxu0
    %v760 = vadd.f32 0.0, %v759
    %v761 = vpop.f32.mrf.mxu0
    %762 = vmatprep.mubr.f32.mxu0 0.0
    %763 = vmatmul.mubr.f32.gmra.mxu0 %v142
    %v764 = vpop.f32.mrf.mxu0
    %v765 = vadd.f32 0.0, %v764
    %v766 = vpop.f32.mrf.mxu0
    %767 = vmatprep.mubr.f32.mxu0 0.0
    %768 = vmatmul.mubr.f32.gmra.mxu0 %v145
    %v769 = vpop.f32.mrf.mxu0
    %v770 = vadd.f32 0.0, %v769
    %v771 = vpop.f32.mrf.mxu0
    %772 = vmatprep.mubr.f32.mxu0 0.0
    %773 = vmatmul.mubr.f32.gmra.mxu0 %v148
    %v774 = vpop.f32.mrf.mxu0
    %v775 = vadd.f32 0.0, %v774
    %v776 = vpop.f32.mrf.mxu0
    %777 = vmatprep.mubr.f32.mxu0 0.0
    %778 = vmatmul.mubr.f32.gmra.mxu0 %v151
    %v779 = vpop.f32.mrf.mxu0
    %v780 = vadd.f32 0.0, %v779
    %v781 = vpop.f32.mrf.mxu0
    %782 = vmatprep.mubr.f32.mxu0 0.0
    %783 = vmatmul.mubr.f32.gmra.mxu0 %v154
    %v784 = vpop.f32.mrf.mxu0
    %v785 = vadd.f32 0.0, %v784
    %v786 = vpop.f32.mrf.mxu0
    %787 = vmatprep.mubr.f32.mxu0 0.0
    %788 = vmatmul.mubr.f32.gmra.mxu0 %v157
    %v789 = vpop.f32.mrf.mxu0
    %v790 = vadd.f32 0.0, %v789
    %v791 = vpop.f32.mrf.mxu0
    %792 = vmatprep.mubr.f32.mxu0 0.0
    %793 = vmatmul.mubr.f32.gmra.mxu0 %v160
    %v794 = vpop.f32.mrf.mxu0
    %v795 = vadd.f32 0.0, %v794
    %v796 = vpop.f32.mrf.mxu0
    %797 = vmatprep.mubr.f32.mxu0 0.0
    %798 = vmatmul.mubr.f32.gmra.mxu0 %v163
    %v799 = vpop.f32.mrf.mxu0
    %v800 = vadd.f32 0.0, %v799
    %v801 = vpop.f32.mrf.mxu0
    %802 = vmatprep.mubr.f32.mxu0 0.0
    %803 = vmatmul.mubr.f32.gmra.mxu0 %v166
    %v804 = vpop.f32.mrf.mxu0
    %v805 = vadd.f32 0.0, %v804
    %v806 = vpop.f32.mrf.mxu0
    %807 = vmatprep.mubr.f32.mxu0 0.0
    %808 = vmatmul.mubr.f32.gmra.mxu0 %v169
    %v809 = vpop.f32.mrf.mxu0
    %v810 = vadd.f32 0.0, %v809
    %v811 = vpop.f32.mrf.mxu0
    %812 = vmatprep.mubr.f32.mxu0 0.0
    %813 = vmatmul.mubr.f32.gmra.mxu0 %v172
    %v814 = vpop.f32.mrf.mxu0
    %v815 = vadd.f32 0.0, %v814
    %v816 = vpop.f32.mrf.mxu0
    %817 = vmatprep.mubr.f32.mxu0 0.0
    %818 = vmatmul.mubr.f32.gmra.mxu0 %v606
    %v819 = vpop.f32.mrf.mxu0
    %v820 = vpop.f32.mrf.mxu0
    %821 = vdwg.mxu0
    %v822 = vadd.f32 %v458, %v675
    %v823 = vadd.f32 %v463, %v680
    %v824 = vadd.f32 %v468, %v685
    %v825 = vadd.f32 %v473, %v690
    %v826 = vadd.f32 %v478, %v695
    %v827 = vadd.f32 %v483, %v700
    %v828 = vadd.f32 %v488, %v705
    %v829 = vadd.f32 %v493, %v710
    %v830 = vadd.f32 %v498, %v715
    %v831 = vadd.f32 %v503, %v720
    %v832 = vadd.f32 %v508, %v725
    %v833 = vadd.f32 %v513, %v730
    %v834 = vadd.f32 %v518, %v735
    %v835 = vadd.f32 %v523, %v740
    %v836 = vadd.f32 %v528, %v745
    %v837 = vadd.f32 %v533, %v750
    %v838 = vadd.f32 %v538, %v755
    %v839 = vadd.f32 %v543, %v760
    %v840 = vadd.f32 %v548, %v765
    %v841 = vadd.f32 %v553, %v770
    %v842 = vadd.f32 %v558, %v775
    %v843 = vadd.f32 %v563, %v780
    %v844 = vadd.f32 %v568, %v785
    %v845 = vadd.f32 %v573, %v790
    %v846 = vadd.f32 %v578, %v795
    %v847 = vadd.f32 %v583, %v800
    %v848 = vadd.f32 %v588, %v805
    %v849 = vadd.f32 %v593, %v810
    %v850 = vadd.f32 %v598, %v815
    %v851 = vld [vmem:[%s2] sm:$0x1]
    %v853 = vlaneseq
    %v854 = vshrl.u32 %v853, 7
    %v855 = vsub.s32 0, %v854
    %v856 = vrot.slane %v851, %v855
    %v858 = vadd.f32 %v822, %v856
    %v859 = vadd.f32 %v823, %v856
    %v860 = vadd.f32 %v824, %v856
    %v861 = vadd.f32 %v825, %v856
    %v862 = vadd.f32 %v826, %v856
    %v863 = vadd.f32 %v827, %v856
    %v864 = vadd.f32 %v828, %v856
    %v865 = vadd.f32 %v829, %v856
    %v866 = vadd.f32 %v830, %v856
    %v867 = vadd.f32 %v831, %v856
    %v868 = vadd.f32 %v832, %v856
    %v869 = vadd.f32 %v833, %v856
    %v870 = vadd.f32 %v834, %v856
    %v871 = vadd.f32 %v835, %v856
    %v872 = vadd.f32 %v836, %v856
    %v873 = vadd.f32 %v837, %v856
    %v874 = vadd.f32 %v838, %v856
    %v875 = vadd.f32 %v839, %v856
    %v876 = vadd.f32 %v840, %v856
    %v877 = vadd.f32 %v841, %v856
    %v878 = vadd.f32 %v842, %v856
    %v879 = vadd.f32 %v843, %v856
    %v880 = vadd.f32 %v844, %v856
    %v881 = vadd.f32 %v845, %v856
    %v882 = vadd.f32 %v846, %v856
    %v883 = vadd.f32 %v847, %v856
    %v884 = vadd.f32 %v848, %v856
    %v885 = vadd.f32 %v849, %v856
    %v886 = vadd.f32 %v850, %v856
    %vm887 = vcmp.gt.f32.partialorder %v858, 0.0
    %vm888 = vcmp.gt.f32.partialorder %v859, 0.0
    %vm889 = vcmp.gt.f32.partialorder %v860, 0.0
    %vm890 = vcmp.gt.f32.partialorder %v861, 0.0
    %vm891 = vcmp.gt.f32.partialorder %v862, 0.0
    %vm892 = vcmp.gt.f32.partialorder %v863, 0.0
    %vm893 = vcmp.gt.f32.partialorder %v864, 0.0
    %vm894 = vcmp.gt.f32.partialorder %v865, 0.0
    %vm895 = vcmp.gt.f32.partialorder %v866, 0.0
    %vm896 = vcmp.gt.f32.partialorder %v867, 0.0
    %vm897 = vcmp.gt.f32.partialorder %v868, 0.0
    %vm898 = vcmp.gt.f32.partialorder %v869, 0.0
    %vm899 = vcmp.gt.f32.partialorder %v870, 0.0
    %vm900 = vcmp.gt.f32.partialorder %v871, 0.0
    %vm901 = vcmp.gt.f32.partialorder %v872, 0.0
    %vm902 = vcmp.gt.f32.partialorder %v873, 0.0
    %vm903 = vcmp.gt.f32.partialorder %v874, 0.0
    %vm904 = vcmp.gt.f32.partialorder %v875, 0.0
    %vm905 = vcmp.gt.f32.partialorder %v876, 0.0
    %vm906 = vcmp.gt.f32.partialorder %v877, 0.0
    %vm907 = vcmp.gt.f32.partialorder %v878, 0.0
    %vm908 = vcmp.gt.f32.partialorder %v879, 0.0
    %vm909 = vcmp.gt.f32.partialorder %v880, 0.0
    %vm910 = vcmp.gt.f32.partialorder %v881, 0.0
    %vm911 = vcmp.gt.f32.partialorder %v882, 0.0
    %vm912 = vcmp.gt.f32.partialorder %v883, 0.0
    %vm913 = vcmp.gt.f32.partialorder %v884, 0.0
    %vm914 = vcmp.gt.f32.partialorder %v885, 0.0
    %vm915 = vcmp.gt.f32.partialorder %v886, 0.0
    %v916 = vmin.f32 %v858, 0.0
    %v917 = vmin.f32 %v859, 0.0
    %v918 = vmin.f32 %v860, 0.0
    %v919 = vmin.f32 %v861, 0.0
    %v920 = vmin.f32 %v862, 0.0
    %v921 = vmin.f32 %v863, 0.0
    %v922 = vmin.f32 %v864, 0.0
    %v923 = vmin.f32 %v865, 0.0
    %v924 = vmin.f32 %v866, 0.0
    %v925 = vmin.f32 %v867, 0.0
    %v926 = vmin.f32 %v868, 0.0
    %v927 = vmin.f32 %v869, 0.0
    %v928 = vmin.f32 %v870, 0.0
    %v929 = vmin.f32 %v871, 0.0
    %v930 = vmin.f32 %v872, 0.0
    %v931 = vmin.f32 %v873, 0.0
    %v932 = vmin.f32 %v874, 0.0
    %v933 = vmin.f32 %v875, 0.0
    %v934 = vmin.f32 %v876, 0.0
    %v935 = vmin.f32 %v877, 0.0
    %v936 = vmin.f32 %v878, 0.0
    %v937 = vmin.f32 %v879, 0.0
    %v938 = vmin.f32 %v880, 0.0
    %v939 = vmin.f32 %v881, 0.0
    %v940 = vmin.f32 %v882, 0.0
    %v941 = vmin.f32 %v883, 0.0
    %v942 = vmin.f32 %v884, 0.0
    %v943 = vmin.f32 %v885, 0.0
    %v944 = vmin.f32 %v886, 0.0
    %v945 = vmul.f32 %v916, 1.442695
    %v946 = vpow.pop %v945
    %v947 = vmul.f32 %v917, 1.442695
    %v948 = vpow.pop %v947
    %v949 = vmul.f32 %v918, 1.442695
    %v950 = vpow.pop %v949
    %v951 = vmul.f32 %v919, 1.442695
    %v952 = vpow.pop %v951
    %v953 = vmul.f32 %v920, 1.442695
    %v954 = vpow.pop %v953
    %v955 = vmul.f32 %v921, 1.442695
    %v956 = vpow.pop %v955
    %v957 = vmul.f32 %v922, 1.442695
    %v958 = vpow.pop %v957
    %v959 = vmul.f32 %v923, 1.442695
    %v960 = vpow.pop %v959
    %v961 = vmul.f32 %v924, 1.442695
    %v962 = vpow.pop %v961
    %v963 = vmul.f32 %v925, 1.442695
    %v964 = vpow.pop %v963
    %v965 = vmul.f32 %v926, 1.442695
    %v966 = vpow.pop %v965
    %v967 = vmul.f32 %v927, 1.442695
    %v968 = vpow.pop %v967
    %v969 = vmul.f32 %v928, 1.442695
    %v970 = vpow.pop %v969
    %v971 = vmul.f32 %v929, 1.442695
    %v972 = vpow.pop %v971
    %v973 = vmul.f32 %v930, 1.442695
    %v974 = vpow.pop %v973
    %v975 = vmul.f32 %v931, 1.442695
    %v976 = vpow.pop %v975
    %v977 = vmul.f32 %v932, 1.442695
    %v978 = vpow.pop %v977
    %v979 = vmul.f32 %v933, 1.442695
    %v980 = vpow.pop %v979
    %v981 = vmul.f32 %v934, 1.442695
    %v982 = vpow.pop %v981
    %v983 = vmul.f32 %v935, 1.442695
    %v984 = vpow.pop %v983
    %v985 = vmul.f32 %v936, 1.442695
    %v986 = vpow.pop %v985
    %v987 = vmul.f32 %v937, 1.442695
    %v988 = vpow.pop %v987
    %v989 = vmul.f32 %v938, 1.442695
    %v990 = vpow.pop %v989
    %v991 = vmul.f32 %v939, 1.442695
    %v992 = vpow.pop %v991
    %v993 = vmul.f32 %v940, 1.442695
    %v994 = vpow.pop %v993
    %v995 = vmul.f32 %v941, 1.442695
    %v996 = vpow.pop %v995
    %v997 = vmul.f32 %v942, 1.442695
    %v998 = vpow.pop %v997
    %v999 = vmul.f32 %v943, 1.442695
    %v1000 = vpow.pop %v999
    %v1001 = vmul.f32 %v944, 1.442695
    %v1002 = vpow.pop %v1001
    %v1003 = vsub.f32 %v946, 1.0
    %v1004 = vsub.f32 %v948, 1.0
    %v1005 = vsub.f32 %v950, 1.0
    %v1006 = vsub.f32 %v952, 1.0
    %v1007 = vsub.f32 %v954, 1.0
    %v1008 = vsub.f32 %v956, 1.0
    %v1009 = vsub.f32 %v958, 1.0
    %v1010 = vsub.f32 %v960, 1.0
    %v1011 = vsub.f32 %v962, 1.0
    %v1012 = vsub.f32 %v964, 1.0
    %v1013 = vsub.f32 %v966, 1.0
    %v1014 = vsub.f32 %v968, 1.0
    %v1015 = vsub.f32 %v970, 1.0
    %v1016 = vsub.f32 %v972, 1.0
    %v1017 = vsub.f32 %v974, 1.0
    %v1018 = vsub.f32 %v976, 1.0
    %v1019 = vsub.f32 %v978, 1.0
    %v1020 = vsub.f32 %v980, 1.0
    %v1021 = vsub.f32 %v982, 1.0
    %v1022 = vsub.f32 %v984, 1.0
    %v1023 = vsub.f32 %v986, 1.0
    %v1024 = vsub.f32 %v988, 1.0
    %v1025 = vsub.f32 %v990, 1.0
    %v1026 = vsub.f32 %v992, 1.0
    %v1027 = vsub.f32 %v994, 1.0
    %v1028 = vsub.f32 %v996, 1.0
    %v1029 = vsub.f32 %v998, 1.0
    %v1030 = vsub.f32 %v1000, 1.0
    %v1031 = vsub.f32 %v1002, 1.0
    %v1032 = vsel %vm887, %v858, %v1003
    %v1033 = vsel %vm888, %v859, %v1004
    %v1034 = vsel %vm889, %v860, %v1005
    %v1035 = vsel %vm890, %v861, %v1006
    %v1036 = vsel %vm891, %v862, %v1007
    %v1037 = vsel %vm892, %v863, %v1008
    %v1038 = vsel %vm893, %v864, %v1009
    %v1039 = vsel %vm894, %v865, %v1010
    %v1040 = vsel %vm895, %v866, %v1011
    %v1041 = vsel %vm896, %v867, %v1012
    %v1042 = vsel %vm897, %v868, %v1013
    %v1043 = vsel %vm898, %v869, %v1014
    %v1044 = vsel %vm899, %v870, %v1015
    %v1045 = vsel %vm900, %v871, %v1016
    %v1046 = vsel %vm901, %v872, %v1017
    %v1047 = vsel %vm902, %v873, %v1018
    %v1048 = vsel %vm903, %v874, %v1019
    %v1049 = vsel %vm904, %v875, %v1020
    %v1050 = vsel %vm905, %v876, %v1021
    %v1051 = vsel %vm906, %v877, %v1022
    %v1052 = vsel %vm907, %v878, %v1023
    %v1053 = vsel %vm908, %v879, %v1024
    %v1054 = vsel %vm909, %v880, %v1025
    %v1055 = vsel %vm910, %v881, %v1026
    %v1056 = vsel %vm911, %v882, %v1027
    %v1057 = vsel %vm912, %v883, %v1028
    %v1058 = vsel %vm913, %v884, %v1029
    %v1059 = vsel %vm914, %v885, %v1030
    %v1060 = vsel %vm915, %v886, %v1031
    %v1061 = vld [vmem:[%s3] sm:$0xff]
    %v1062 = vld [vmem:[%s3 + $0x8] sm:$0xff]
    %v1063 = vld [vmem:[%s3 + $0x10] sm:$0xff]
    %vm1064 = vcmask 64512
    %v1066 = vsel %vm1064, %v1033, 0
    %v1069 = vsel %vm1064, %v1035, 0
    %v1072 = vsel %vm1064, %v1037, 0
    %v1075 = vsel %vm1064, %v1039, 0
    %v1078 = vsel %vm1064, %v1041, 0
    %v1081 = vsel %vm1064, %v1043, 0
    %v1084 = vsel %vm1064, %v1045, 0
    %v1087 = vsel %vm1064, %v1047, 0
    %v1090 = vsel %vm1064, %v1049, 0
    %v1093 = vsel %vm1064, %v1051, 0
    %v1096 = vsel %vm1064, %v1053, 0
    %v1099 = vsel %vm1064, %v1055, 0
    %v1102 = vsel %vm1064, %v1057, 0
    %v1105 = vsel %vm1064, %v1059, 0
    %1107 = vmatprep.subr.mxu0 0.0
    %1108 = vmatpush1.msra.mxu0 0.0
    %1109 = vmatprep.subr.mxu0 0.0
    %1110 = vmatpush1.msra.mxu0 0.0
    %1111 = vmatprep.subr.mxu0 0.0
    %1112 = vmatpush1.msra.mxu0 0.0
    %1113 = vmatprep.subr.mxu0 0.0
    %1114 = vmatpush1.msra.mxu0 0.0
    %1115 = vmatprep.subr.mxu0 0.0
    %1116 = vmatpush1.msra.mxu0 0.0
    %1117 = vmatprep.subr.mxu0 0.0
    %1118 = vmatpush1.msra.mxu0 0.0
    %1119 = vmatprep.subr.mxu0 0.0
    %1120 = vmatpush1.msra.mxu0 0.0
    %1121 = vmatprep.subr.mxu0 0.0
    %1122 = vmatpush1.msra.mxu0 0.0
    %1123 = vmatprep.subr.mxu0 0.0
    %1124 = vmatpush1.msra.mxu0 0.0
    %1125 = vmatprep.subr.mxu0 0.0
    %1126 = vmatpush1.msra.mxu0 0.0
    %1127 = vmatprep.subr.mxu0 0.0
    %1128 = vmatpush1.msra.mxu0 0.0
    %1129 = vmatprep.subr.mxu0 0.0
    %1130 = vmatpush1.msra.mxu0 0.0
    %1131 = vmatprep.subr.mxu0 0.0
    %1132 = vmatpush1.msra.mxu0 0.0
    %1133 = vmatprep.subr.mxu0 0.0
    %1134 = vmatpush1.msra.mxu0 0.0
    %1135 = vmatprep.subr.mxu0 0.0
    %1136 = vmatpush1.msra.mxu0 0.0
    %1137 = vmatprep.subr.mxu0 0.0
    %1138 = vmatpush1.msra.mxu0 %v1062
    %1139 = vmatprep.subr.mxu0 0.0
    %1140 = vmatpush2.msra.mxu0 0.0
    %1141 = vmatprep.subr.mxu0 0.0
    %1142 = vmatpush2.msra.mxu0 0.0
    %1143 = vmatprep.subr.mxu0 0.0
    %1144 = vmatpush2.msra.mxu0 0.0
    %1145 = vmatprep.subr.mxu0 0.0
    %1146 = vmatpush2.msra.mxu0 0.0
    %1147 = vmatprep.subr.mxu0 0.0
    %1148 = vmatpush2.msra.mxu0 0.0
    %1149 = vmatprep.subr.mxu0 0.0
    %1150 = vmatpush2.msra.mxu0 0.0
    %1151 = vmatprep.subr.mxu0 0.0
    %1152 = vmatpush2.msra.mxu0 0.0
    %1153 = vmatprep.subr.mxu0 0.0
    %1154 = vmatpush2.msra.mxu0 0.0
    %1155 = vmatprep.subr.mxu0 0.0
    %1156 = vmatpush2.msra.mxu0 0.0
    %1157 = vmatprep.subr.mxu0 0.0
    %1158 = vmatpush2.msra.mxu0 0.0
    %1159 = vmatprep.subr.mxu0 0.0
    %1160 = vmatpush2.msra.mxu0 0.0
    %1161 = vmatprep.subr.mxu0 0.0
    %1162 = vmatpush2.msra.mxu0 0.0
    %1163 = vmatprep.subr.mxu0 0.0
    %1164 = vmatpush2.msra.mxu0 0.0
    %1165 = vmatprep.subr.mxu0 0.0
    %1166 = vmatpush2.msra.mxu0 0.0
    %1167 = vmatprep.subr.mxu0 0.0
    %1168 = vmatpush2.msra.mxu0 0.0
    %1169 = vmatprep.subr.mxu0 0.0
    %1170 = vmatpush2.msra.mxu0 0.0
    %1171 = vmatprep.mubr.f32.mxu0 0.0
    %1172 = vmatmul.mubr.f32.gmra.mxu0 %v1066
    %v1173 = vpop.f32.mrf.mxu0
    %v1174 = vadd.f32 0.0, %v1173
    %v1175 = vpop.f32.mrf.mxu0
    %1176 = vmatprep.mubr.f32.mxu0 0.0
    %1177 = vmatmul.mubr.f32.gmra.mxu0 %v1069
    %v1178 = vpop.f32.mrf.mxu0
    %v1179 = vadd.f32 0.0, %v1178
    %v1180 = vpop.f32.mrf.mxu0
    %1181 = vmatprep.mubr.f32.mxu0 0.0
    %1182 = vmatmul.mubr.f32.gmra.mxu0 %v1072
    %v1183 = vpop.f32.mrf.mxu0
    %v1184 = vadd.f32 0.0, %v1183
    %v1185 = vpop.f32.mrf.mxu0
    %1186 = vmatprep.mubr.f32.mxu0 0.0
    %1187 = vmatmul.mubr.f32.gmra.mxu0 %v1075
    %v1188 = vpop.f32.mrf.mxu0
    %v1189 = vadd.f32 0.0, %v1188
    %v1190 = vpop.f32.mrf.mxu0
    %1191 = vmatprep.mubr.f32.mxu0 0.0
    %1192 = vmatmul.mubr.f32.gmra.mxu0 %v1078
    %v1193 = vpop.f32.mrf.mxu0
    %v1194 = vadd.f32 0.0, %v1193
    %v1195 = vpop.f32.mrf.mxu0
    %1196 = vmatprep.mubr.f32.mxu0 0.0
    %1197 = vmatmul.mubr.f32.gmra.mxu0 %v1081
    %v1198 = vpop.f32.mrf.mxu0
    %v1199 = vadd.f32 0.0, %v1198
    %v1200 = vpop.f32.mrf.mxu0
    %1201 = vmatprep.mubr.f32.mxu0 0.0
    %1202 = vmatmul.mubr.f32.gmra.mxu0 %v1084
    %v1203 = vpop.f32.mrf.mxu0
    %v1204 = vadd.f32 0.0, %v1203
    %v1205 = vpop.f32.mrf.mxu0
    %1206 = vmatprep.mubr.f32.mxu0 0.0
    %1207 = vmatmul.mubr.f32.gmra.mxu0 %v1087
    %v1208 = vpop.f32.mrf.mxu0
    %v1209 = vadd.f32 0.0, %v1208
    %v1210 = vpop.f32.mrf.mxu0
    %1211 = vmatprep.mubr.f32.mxu0 0.0
    %1212 = vmatmul.mubr.f32.gmra.mxu0 %v1090
    %v1213 = vpop.f32.mrf.mxu0
    %v1214 = vadd.f32 0.0, %v1213
    %v1215 = vpop.f32.mrf.mxu0
    %1216 = vmatprep.mubr.f32.mxu0 0.0
    %1217 = vmatmul.mubr.f32.gmra.mxu0 %v1093
    %v1218 = vpop.f32.mrf.mxu0
    %v1219 = vadd.f32 0.0, %v1218
    %v1220 = vpop.f32.mrf.mxu0
    %1221 = vmatprep.mubr.f32.mxu0 0.0
    %1222 = vmatmul.mubr.f32.gmra.mxu0 %v1096
    %v1223 = vpop.f32.mrf.mxu0
    %v1224 = vadd.f32 0.0, %v1223
    %v1225 = vpop.f32.mrf.mxu0
    %1226 = vmatprep.mubr.f32.mxu0 0.0
    %1227 = vmatmul.mubr.f32.gmra.mxu0 %v1099
    %v1228 = vpop.f32.mrf.mxu0
    %v1229 = vadd.f32 0.0, %v1228
    %v1230 = vpop.f32.mrf.mxu0
    %1231 = vmatprep.mubr.f32.mxu0 0.0
    %1232 = vmatmul.mubr.f32.gmra.mxu0 %v1102
    %v1233 = vpop.f32.mrf.mxu0
    %v1234 = vadd.f32 0.0, %v1233
    %v1235 = vpop.f32.mrf.mxu0
    %1236 = vmatprep.mubr.f32.mxu0 0.0
    %1237 = vmatmul.mubr.f32.gmra.mxu0 %v1105
    %v1238 = vpop.f32.mrf.mxu0
    %v1239 = vpop.f32.mrf.mxu0
    %1240 = vdwg.mxu0
    %v1242 = vsel %vm1064, %v1032, 0
    %v1245 = vsel %vm1064, %v1034, 0
    %v1248 = vsel %vm1064, %v1036, 0
    %v1251 = vsel %vm1064, %v1038, 0
    %v1254 = vsel %vm1064, %v1040, 0
    %v1257 = vsel %vm1064, %v1042, 0
    %v1260 = vsel %vm1064, %v1044, 0
    %v1263 = vsel %vm1064, %v1046, 0
    %v1266 = vsel %vm1064, %v1048, 0
    %v1269 = vsel %vm1064, %v1050, 0
    %v1272 = vsel %vm1064, %v1052, 0
    %v1275 = vsel %vm1064, %v1054, 0
    %v1278 = vsel %vm1064, %v1056, 0
    %v1281 = vsel %vm1064, %v1058, 0
    %1283 = vmatprep.subr.mxu0 0.0
    %1284 = vmatpush1.msra.mxu0 0.0
    %1285 = vmatprep.subr.mxu0 0.0
    %1286 = vmatpush1.msra.mxu0 0.0
    %1287 = vmatprep.subr.mxu0 0.0
    %1288 = vmatpush1.msra.mxu0 0.0
    %1289 = vmatprep.subr.mxu0 0.0
    %1290 = vmatpush1.msra.mxu0 0.0
    %1291 = vmatprep.subr.mxu0 0.0
    %1292 = vmatpush1.msra.mxu0 0.0
    %1293 = vmatprep.subr.mxu0 0.0
    %1294 = vmatpush1.msra.mxu0 0.0
    %1295 = vmatprep.subr.mxu0 0.0
    %1296 = vmatpush1.msra.mxu0 0.0
    %1297 = vmatprep.subr.mxu0 0.0
    %1298 = vmatpush1.msra.mxu0 0.0
    %1299 = vmatprep.subr.mxu0 0.0
    %1300 = vmatpush1.msra.mxu0 0.0
    %1301 = vmatprep.subr.mxu0 0.0
    %1302 = vmatpush1.msra.mxu0 0.0
    %1303 = vmatprep.subr.mxu0 0.0
    %1304 = vmatpush1.msra.mxu0 0.0
    %1305 = vmatprep.subr.mxu0 0.0
    %1306 = vmatpush1.msra.mxu0 0.0
    %1307 = vmatprep.subr.mxu0 0.0
    %1308 = vmatpush1.msra.mxu0 0.0
    %1309 = vmatprep.subr.mxu0 0.0
    %1310 = vmatpush1.msra.mxu0 0.0
    %1311 = vmatprep.subr.mxu0 0.0
    %1312 = vmatpush1.msra.mxu0 0.0
    %1313 = vmatprep.subr.mxu0 0.0
    %1314 = vmatpush1.msra.mxu0 %v1061
    %1315 = vmatprep.subr.mxu0 0.0
    %1316 = vmatpush2.msra.mxu0 0.0
    %1317 = vmatprep.subr.mxu0 0.0
    %1318 = vmatpush2.msra.mxu0 0.0
    %1319 = vmatprep.subr.mxu0 0.0
    %1320 = vmatpush2.msra.mxu0 0.0
    %1321 = vmatprep.subr.mxu0 0.0
    %1322 = vmatpush2.msra.mxu0 0.0
    %1323 = vmatprep.subr.mxu0 0.0
    %1324 = vmatpush2.msra.mxu0 0.0
    %1325 = vmatprep.subr.mxu0 0.0
    %1326 = vmatpush2.msra.mxu0 0.0
    %1327 = vmatprep.subr.mxu0 0.0
    %1328 = vmatpush2.msra.mxu0 0.0
    %1329 = vmatprep.subr.mxu0 0.0
    %1330 = vmatpush2.msra.mxu0 0.0
    %1331 = vmatprep.subr.mxu0 0.0
    %1332 = vmatpush2.msra.mxu0 0.0
    %1333 = vmatprep.subr.mxu0 0.0
    %1334 = vmatpush2.msra.mxu0 0.0
    %1335 = vmatprep.subr.mxu0 0.0
    %1336 = vmatpush2.msra.mxu0 0.0
    %1337 = vmatprep.subr.mxu0 0.0
    %1338 = vmatpush2.msra.mxu0 0.0
    %1339 = vmatprep.subr.mxu0 0.0
    %1340 = vmatpush2.msra.mxu0 0.0
    %1341 = vmatprep.subr.mxu0 0.0
    %1342 = vmatpush2.msra.mxu0 0.0
    %1343 = vmatprep.subr.mxu0 0.0
    %1344 = vmatpush2.msra.mxu0 0.0
    %1345 = vmatprep.subr.mxu0 0.0
    %1346 = vmatpush2.msra.mxu0 0.0
    %1347 = vmatprep.mubr.f32.mxu0 0.0
    %1348 = vmatmul.mubr.f32.gmra.mxu0 %v1242
    %v1349 = vpop.f32.mrf.mxu0
    %v1350 = vadd.f32 %v1174, %v1349
    %v1351 = vpop.f32.mrf.mxu0
    %1352 = vmatprep.mubr.f32.mxu0 0.0
    %1353 = vmatmul.mubr.f32.gmra.mxu0 %v1245
    %v1354 = vpop.f32.mrf.mxu0
    %v1355 = vadd.f32 %v1179, %v1354
    %v1356 = vpop.f32.mrf.mxu0
    %1357 = vmatprep.mubr.f32.mxu0 0.0
    %1358 = vmatmul.mubr.f32.gmra.mxu0 %v1248
    %v1359 = vpop.f32.mrf.mxu0
    %v1360 = vadd.f32 %v1184, %v1359
    %v1361 = vpop.f32.mrf.mxu0
    %1362 = vmatprep.mubr.f32.mxu0 0.0
    %1363 = vmatmul.mubr.f32.gmra.mxu0 %v1251
    %v1364 = vpop.f32.mrf.mxu0
    %v1365 = vadd.f32 %v1189, %v1364
    %v1366 = vpop.f32.mrf.mxu0
    %1367 = vmatprep.mubr.f32.mxu0 0.0
    %1368 = vmatmul.mubr.f32.gmra.mxu0 %v1254
    %v1369 = vpop.f32.mrf.mxu0
    %v1370 = vadd.f32 %v1194, %v1369
    %v1371 = vpop.f32.mrf.mxu0
    %1372 = vmatprep.mubr.f32.mxu0 0.0
    %1373 = vmatmul.mubr.f32.gmra.mxu0 %v1257
    %v1374 = vpop.f32.mrf.mxu0
    %v1375 = vadd.f32 %v1199, %v1374
    %v1376 = vpop.f32.mrf.mxu0
    %1377 = vmatprep.mubr.f32.mxu0 0.0
    %1378 = vmatmul.mubr.f32.gmra.mxu0 %v1260
    %v1379 = vpop.f32.mrf.mxu0
    %v1380 = vadd.f32 %v1204, %v1379
    %v1381 = vpop.f32.mrf.mxu0
    %1382 = vmatprep.mubr.f32.mxu0 0.0
    %1383 = vmatmul.mubr.f32.gmra.mxu0 %v1263
    %v1384 = vpop.f32.mrf.mxu0
    %v1385 = vadd.f32 %v1209, %v1384
    %v1386 = vpop.f32.mrf.mxu0
    %1387 = vmatprep.mubr.f32.mxu0 0.0
    %1388 = vmatmul.mubr.f32.gmra.mxu0 %v1266
    %v1389 = vpop.f32.mrf.mxu0
    %v1390 = vadd.f32 %v1214, %v1389
    %v1391 = vpop.f32.mrf.mxu0
    %1392 = vmatprep.mubr.f32.mxu0 0.0
    %1393 = vmatmul.mubr.f32.gmra.mxu0 %v1269
    %v1394 = vpop.f32.mrf.mxu0
    %v1395 = vadd.f32 %v1219, %v1394
    %v1396 = vpop.f32.mrf.mxu0
    %1397 = vmatprep.mubr.f32.mxu0 0.0
    %1398 = vmatmul.mubr.f32.gmra.mxu0 %v1272
    %v1399 = vpop.f32.mrf.mxu0
    %v1400 = vadd.f32 %v1224, %v1399
    %v1401 = vpop.f32.mrf.mxu0
    %1402 = vmatprep.mubr.f32.mxu0 0.0
    %1403 = vmatmul.mubr.f32.gmra.mxu0 %v1275
    %v1404 = vpop.f32.mrf.mxu0
    %v1405 = vadd.f32 %v1229, %v1404
    %v1406 = vpop.f32.mrf.mxu0
    %1407 = vmatprep.mubr.f32.mxu0 0.0
    %1408 = vmatmul.mubr.f32.gmra.mxu0 %v1278
    %v1409 = vpop.f32.mrf.mxu0
    %v1410 = vadd.f32 %v1234, %v1409
    %v1411 = vpop.f32.mrf.mxu0
    %1412 = vmatprep.mubr.f32.mxu0 0.0
    %1413 = vmatmul.mubr.f32.gmra.mxu0 %v1281
    %v1414 = vpop.f32.mrf.mxu0
    %v1415 = vpop.f32.mrf.mxu0
    %1416 = vdwg.mxu0
    %v1418 = vsel %vm1064, %v1060, 0
    %1420 = vmatprep.subr.mxu0 0.0
    %1421 = vmatpush1.msra.mxu0 0.0
    %1422 = vmatprep.subr.mxu0 0.0
    %1423 = vmatpush1.msra.mxu0 0.0
    %1424 = vmatprep.subr.mxu0 0.0
    %1425 = vmatpush1.msra.mxu0 0.0
    %1426 = vmatprep.subr.mxu0 0.0
    %1427 = vmatpush1.msra.mxu0 0.0
    %1428 = vmatprep.subr.mxu0 0.0
    %1429 = vmatpush1.msra.mxu0 0.0
    %1430 = vmatprep.subr.mxu0 0.0
    %1431 = vmatpush1.msra.mxu0 0.0
    %1432 = vmatprep.subr.mxu0 0.0
    %1433 = vmatpush1.msra.mxu0 0.0
    %1434 = vmatprep.subr.mxu0 0.0
    %1435 = vmatpush1.msra.mxu0 0.0
    %1436 = vmatprep.subr.mxu0 0.0
    %1437 = vmatpush1.msra.mxu0 0.0
    %1438 = vmatprep.subr.mxu0 0.0
    %1439 = vmatpush1.msra.mxu0 0.0
    %1440 = vmatprep.subr.mxu0 0.0
    %1441 = vmatpush1.msra.mxu0 0.0
    %1442 = vmatprep.subr.mxu0 0.0
    %1443 = vmatpush1.msra.mxu0 0.0
    %1444 = vmatprep.subr.mxu0 0.0
    %1445 = vmatpush1.msra.mxu0 0.0
    %1446 = vmatprep.subr.mxu0 0.0
    %1447 = vmatpush1.msra.mxu0 0.0
    %1448 = vmatprep.subr.mxu0 0.0
    %1449 = vmatpush1.msra.mxu0 0.0
    %1450 = vmatprep.subr.mxu0 0.0
    %1451 = vmatpush1.msra.mxu0 %v1063
    %1452 = vmatprep.subr.mxu0 0.0
    %1453 = vmatpush2.msra.mxu0 0.0
    %1454 = vmatprep.subr.mxu0 0.0
    %1455 = vmatpush2.msra.mxu0 0.0
    %1456 = vmatprep.subr.mxu0 0.0
    %1457 = vmatpush2.msra.mxu0 0.0
    %1458 = vmatprep.subr.mxu0 0.0
    %1459 = vmatpush2.msra.mxu0 0.0
    %1460 = vmatprep.subr.mxu0 0.0
    %1461 = vmatpush2.msra.mxu0 0.0
    %1462 = vmatprep.subr.mxu0 0.0
    %1463 = vmatpush2.msra.mxu0 0.0
    %1464 = vmatprep.subr.mxu0 0.0
    %1465 = vmatpush2.msra.mxu0 0.0
    %1466 = vmatprep.subr.mxu0 0.0
    %1467 = vmatpush2.msra.mxu0 0.0
    %1468 = vmatprep.subr.mxu0 0.0
    %1469 = vmatpush2.msra.mxu0 0.0
    %1470 = vmatprep.subr.mxu0 0.0
    %1471 = vmatpush2.msra.mxu0 0.0
    %1472 = vmatprep.subr.mxu0 0.0
    %1473 = vmatpush2.msra.mxu0 0.0
    %1474 = vmatprep.subr.mxu0 0.0
    %1475 = vmatpush2.msra.mxu0 0.0
    %1476 = vmatprep.subr.mxu0 0.0
    %1477 = vmatpush2.msra.mxu0 0.0
    %1478 = vmatprep.subr.mxu0 0.0
    %1479 = vmatpush2.msra.mxu0 0.0
    %1480 = vmatprep.subr.mxu0 0.0
    %1481 = vmatpush2.msra.mxu0 0.0
    %1482 = vmatprep.subr.mxu0 0.0
    %1483 = vmatpush2.msra.mxu0 0.0
    %1484 = vmatprep.mubr.f32.mxu0 0.0
    %1485 = vmatmul.mubr.f32.gmra.mxu0 %v1245
    %v1486 = vpop.f32.mrf.mxu0
    %v1487 = vadd.f32 0.0, %v1486
    %v1488 = vpop.f32.mrf.mxu0
    %1489 = vmatprep.mubr.f32.mxu0 0.0
    %1490 = vmatmul.mubr.f32.gmra.mxu0 %v1248
    %v1491 = vpop.f32.mrf.mxu0
    %v1492 = vadd.f32 0.0, %v1491
    %v1493 = vpop.f32.mrf.mxu0
    %1494 = vmatprep.mubr.f32.mxu0 0.0
    %1495 = vmatmul.mubr.f32.gmra.mxu0 %v1251
    %v1496 = vpop.f32.mrf.mxu0
    %v1497 = vadd.f32 0.0, %v1496
    %v1498 = vpop.f32.mrf.mxu0
    %1499 = vmatprep.mubr.f32.mxu0 0.0
    %1500 = vmatmul.mubr.f32.gmra.mxu0 %v1254
    %v1501 = vpop.f32.mrf.mxu0
    %v1502 = vadd.f32 0.0, %v1501
    %v1503 = vpop.f32.mrf.mxu0
    %1504 = vmatprep.mubr.f32.mxu0 0.0
    %1505 = vmatmul.mubr.f32.gmra.mxu0 %v1257
    %v1506 = vpop.f32.mrf.mxu0
    %v1507 = vadd.f32 0.0, %v1506
    %v1508 = vpop.f32.mrf.mxu0
    %1509 = vmatprep.mubr.f32.mxu0 0.0
    %1510 = vmatmul.mubr.f32.gmra.mxu0 %v1260
    %v1511 = vpop.f32.mrf.mxu0
    %v1512 = vadd.f32 0.0, %v1511
    %v1513 = vpop.f32.mrf.mxu0
    %1514 = vmatprep.mubr.f32.mxu0 0.0
    %1515 = vmatmul.mubr.f32.gmra.mxu0 %v1263
    %v1516 = vpop.f32.mrf.mxu0
    %v1517 = vadd.f32 0.0, %v1516
    %v1518 = vpop.f32.mrf.mxu0
    %1519 = vmatprep.mubr.f32.mxu0 0.0
    %1520 = vmatmul.mubr.f32.gmra.mxu0 %v1266
    %v1521 = vpop.f32.mrf.mxu0
    %v1522 = vadd.f32 0.0, %v1521
    %v1523 = vpop.f32.mrf.mxu0
    %1524 = vmatprep.mubr.f32.mxu0 0.0
    %1525 = vmatmul.mubr.f32.gmra.mxu0 %v1269
    %v1526 = vpop.f32.mrf.mxu0
    %v1527 = vadd.f32 0.0, %v1526
    %v1528 = vpop.f32.mrf.mxu0
    %1529 = vmatprep.mubr.f32.mxu0 0.0
    %1530 = vmatmul.mubr.f32.gmra.mxu0 %v1272
    %v1531 = vpop.f32.mrf.mxu0
    %v1532 = vadd.f32 0.0, %v1531
    %v1533 = vpop.f32.mrf.mxu0
    %1534 = vmatprep.mubr.f32.mxu0 0.0
    %1535 = vmatmul.mubr.f32.gmra.mxu0 %v1275
    %v1536 = vpop.f32.mrf.mxu0
    %v1537 = vadd.f32 0.0, %v1536
    %v1538 = vpop.f32.mrf.mxu0
    %1539 = vmatprep.mubr.f32.mxu0 0.0
    %1540 = vmatmul.mubr.f32.gmra.mxu0 %v1278
    %v1541 = vpop.f32.mrf.mxu0
    %v1542 = vadd.f32 0.0, %v1541
    %v1543 = vpop.f32.mrf.mxu0
    %1544 = vmatprep.mubr.f32.mxu0 0.0
    %1545 = vmatmul.mubr.f32.gmra.mxu0 %v1281
    %v1546 = vpop.f32.mrf.mxu0
    %v1547 = vadd.f32 0.0, %v1546
    %v1548 = vpop.f32.mrf.mxu0
    %1549 = vmatprep.mubr.f32.mxu0 0.0
    %1550 = vmatmul.mubr.f32.gmra.mxu0 %v1418
    %v1551 = vpop.f32.mrf.mxu0
    %v1552 = vpop.f32.mrf.mxu0
    %1553 = vdwg.mxu0
    %v1554 = vadd.f32 %v1350, %v1487
    %v1555 = vadd.f32 %v1355, %v1492
    %v1556 = vadd.f32 %v1360, %v1497
    %v1557 = vadd.f32 %v1365, %v1502
    %v1558 = vadd.f32 %v1370, %v1507
    %v1559 = vadd.f32 %v1375, %v1512
    %v1560 = vadd.f32 %v1380, %v1517
    %v1561 = vadd.f32 %v1385, %v1522
    %v1562 = vadd.f32 %v1390, %v1527
    %v1563 = vadd.f32 %v1395, %v1532
    %v1564 = vadd.f32 %v1400, %v1537
    %v1565 = vadd.f32 %v1405, %v1542
    %v1566 = vadd.f32 %v1410, %v1547
    %v1567 = vld [vmem:[%s4] sm:$0x1]
    %v1569 = vlaneseq
    %v1570 = vshrl.u32 %v1569, 7
    %v1571 = vsub.s32 0, %v1570
    %v1572 = vrot.slane %v1567, %v1571
    %v1574 = vadd.f32 %v1554, %v1572
    %v1575 = vadd.f32 %v1555, %v1572
    %v1576 = vadd.f32 %v1556, %v1572
    %v1577 = vadd.f32 %v1557, %v1572
    %v1578 = vadd.f32 %v1558, %v1572
    %v1579 = vadd.f32 %v1559, %v1572
    %v1580 = vadd.f32 %v1560, %v1572
    %v1581 = vadd.f32 %v1561, %v1572
    %v1582 = vadd.f32 %v1562, %v1572
    %v1583 = vadd.f32 %v1563, %v1572
    %v1584 = vadd.f32 %v1564, %v1572
    %v1585 = vadd.f32 %v1565, %v1572
    %v1586 = vadd.f32 %v1566, %v1572
    %vm1587 = vcmp.gt.f32.partialorder %v1574, 0.0
    %vm1588 = vcmp.gt.f32.partialorder %v1575, 0.0
    %vm1589 = vcmp.gt.f32.partialorder %v1576, 0.0
    %vm1590 = vcmp.gt.f32.partialorder %v1577, 0.0
    %vm1591 = vcmp.gt.f32.partialorder %v1578, 0.0
    %vm1592 = vcmp.gt.f32.partialorder %v1579, 0.0
    %vm1593 = vcmp.gt.f32.partialorder %v1580, 0.0
    %vm1594 = vcmp.gt.f32.partialorder %v1581, 0.0
    %vm1595 = vcmp.gt.f32.partialorder %v1582, 0.0
    %vm1596 = vcmp.gt.f32.partialorder %v1583, 0.0
    %vm1597 = vcmp.gt.f32.partialorder %v1584, 0.0
    %vm1598 = vcmp.gt.f32.partialorder %v1585, 0.0
    %vm1599 = vcmp.gt.f32.partialorder %v1586, 0.0
    %v1600 = vmin.f32 %v1574, 0.0
    %v1601 = vmin.f32 %v1575, 0.0
    %v1602 = vmin.f32 %v1576, 0.0
    %v1603 = vmin.f32 %v1577, 0.0
    %v1604 = vmin.f32 %v1578, 0.0
    %v1605 = vmin.f32 %v1579, 0.0
    %v1606 = vmin.f32 %v1580, 0.0
    %v1607 = vmin.f32 %v1581, 0.0
    %v1608 = vmin.f32 %v1582, 0.0
    %v1609 = vmin.f32 %v1583, 0.0
    %v1610 = vmin.f32 %v1584, 0.0
    %v1611 = vmin.f32 %v1585, 0.0
    %v1612 = vmin.f32 %v1586, 0.0
    %v1613 = vmul.f32 %v1600, 1.442695
    %v1614 = vpow.pop %v1613
    %v1615 = vmul.f32 %v1601, 1.442695
    %v1616 = vpow.pop %v1615
    %v1617 = vmul.f32 %v1602, 1.442695
    %v1618 = vpow.pop %v1617
    %v1619 = vmul.f32 %v1603, 1.442695
    %v1620 = vpow.pop %v1619
    %v1621 = vmul.f32 %v1604, 1.442695
    %v1622 = vpow.pop %v1621
    %v1623 = vmul.f32 %v1605, 1.442695
    %v1624 = vpow.pop %v1623
    %v1625 = vmul.f32 %v1606, 1.442695
    %v1626 = vpow.pop %v1625
    %v1627 = vmul.f32 %v1607, 1.442695
    %v1628 = vpow.pop %v1627
    %v1629 = vmul.f32 %v1608, 1.442695
    %v1630 = vpow.pop %v1629
    %v1631 = vmul.f32 %v1609, 1.442695
    %v1632 = vpow.pop %v1631
    %v1633 = vmul.f32 %v1610, 1.442695
    %v1634 = vpow.pop %v1633
    %v1635 = vmul.f32 %v1611, 1.442695
    %v1636 = vpow.pop %v1635
    %v1637 = vmul.f32 %v1612, 1.442695
    %v1638 = vpow.pop %v1637
    %v1639 = vsub.f32 %v1614, 1.0
    %v1640 = vsub.f32 %v1616, 1.0
    %v1641 = vsub.f32 %v1618, 1.0
    %v1642 = vsub.f32 %v1620, 1.0
    %v1643 = vsub.f32 %v1622, 1.0
    %v1644 = vsub.f32 %v1624, 1.0
    %v1645 = vsub.f32 %v1626, 1.0
    %v1646 = vsub.f32 %v1628, 1.0
    %v1647 = vsub.f32 %v1630, 1.0
    %v1648 = vsub.f32 %v1632, 1.0
    %v1649 = vsub.f32 %v1634, 1.0
    %v1650 = vsub.f32 %v1636, 1.0
    %v1651 = vsub.f32 %v1638, 1.0
    %v1652 = vsel %vm1587, %v1574, %v1639
    %v1653 = vsel %vm1588, %v1575, %v1640
    %v1654 = vsel %vm1589, %v1576, %v1641
    %v1655 = vsel %vm1590, %v1577, %v1642
    %v1656 = vsel %vm1591, %v1578, %v1643
    %v1657 = vsel %vm1592, %v1579, %v1644
    %v1658 = vsel %vm1593, %v1580, %v1645
    %v1659 = vsel %vm1594, %v1581, %v1646
    %v1660 = vsel %vm1595, %v1582, %v1647
    %v1661 = vsel %vm1596, %v1583, %v1648
    %v1662 = vsel %vm1597, %v1584, %v1649
    %v1663 = vsel %vm1598, %v1585, %v1650
    %v1664 = vsel %vm1599, %v1586, %v1651
    %v1665 = vld [vmem:[%s5] sm:$0xff]
    %v1666 = vld [vmem:[%s5 + $0x8] sm:$0xff]
    %v1667 = vld [vmem:[%s5 + $0x10] sm:$0xff]
    %v1669 = vsel %vm1064, %v1653, 0
    %v1672 = vsel %vm1064, %v1655, 0
    %v1675 = vsel %vm1064, %v1657, 0
    %v1678 = vsel %vm1064, %v1659, 0
    %v1681 = vsel %vm1064, %v1661, 0
    %v1684 = vsel %vm1064, %v1663, 0
    %1686 = vmatprep.subr.mxu0 0.0
    %1687 = vmatpush1.msra.mxu0 0.0
    %1688 = vmatprep.subr.mxu0 0.0
    %1689 = vmatpush1.msra.mxu0 0.0
    %1690 = vmatprep.subr.mxu0 0.0
    %1691 = vmatpush1.msra.mxu0 0.0
    %1692 = vmatprep.subr.mxu0 0.0
    %1693 = vmatpush1.msra.mxu0 0.0
    %1694 = vmatprep.subr.mxu0 0.0
    %1695 = vmatpush1.msra.mxu0 0.0
    %1696 = vmatprep.subr.mxu0 0.0
    %1697 = vmatpush1.msra.mxu0 0.0
    %1698 = vmatprep.subr.mxu0 0.0
    %1699 = vmatpush1.msra.mxu0 0.0
    %1700 = vmatprep.subr.mxu0 0.0
    %1701 = vmatpush1.msra.mxu0 0.0
    %1702 = vmatprep.subr.mxu0 0.0
    %1703 = vmatpush1.msra.mxu0 0.0
    %1704 = vmatprep.subr.mxu0 0.0
    %1705 = vmatpush1.msra.mxu0 0.0
    %1706 = vmatprep.subr.mxu0 0.0
    %1707 = vmatpush1.msra.mxu0 0.0
    %1708 = vmatprep.subr.mxu0 0.0
    %1709 = vmatpush1.msra.mxu0 0.0
    %1710 = vmatprep.subr.mxu0 0.0
    %1711 = vmatpush1.msra.mxu0 0.0
    %1712 = vmatprep.subr.mxu0 0.0
    %1713 = vmatpush1.msra.mxu0 0.0
    %1714 = vmatprep.subr.mxu0 0.0
    %1715 = vmatpush1.msra.mxu0 0.0
    %1716 = vmatprep.subr.mxu0 0.0
    %1717 = vmatpush1.msra.mxu0 %v1666
    %1718 = vmatprep.subr.mxu0 0.0
    %1719 = vmatpush2.msra.mxu0 0.0
    %1720 = vmatprep.subr.mxu0 0.0
    %1721 = vmatpush2.msra.mxu0 0.0
    %1722 = vmatprep.subr.mxu0 0.0
    %1723 = vmatpush2.msra.mxu0 0.0
    %1724 = vmatprep.subr.mxu0 0.0
    %1725 = vmatpush2.msra.mxu0 0.0
    %1726 = vmatprep.subr.mxu0 0.0
    %1727 = vmatpush2.msra.mxu0 0.0
    %1728 = vmatprep.subr.mxu0 0.0
    %1729 = vmatpush2.msra.mxu0 0.0
    %1730 = vmatprep.subr.mxu0 0.0
    %1731 = vmatpush2.msra.mxu0 0.0
    %1732 = vmatprep.subr.mxu0 0.0
    %1733 = vmatpush2.msra.mxu0 0.0
    %1734 = vmatprep.subr.mxu0 0.0
    %1735 = vmatpush2.msra.mxu0 0.0
    %1736 = vmatprep.subr.mxu0 0.0
    %1737 = vmatpush2.msra.mxu0 0.0
    %1738 = vmatprep.subr.mxu0 0.0
    %1739 = vmatpush2.msra.mxu0 0.0
    %1740 = vmatprep.subr.mxu0 0.0
    %1741 = vmatpush2.msra.mxu0 0.0
    %1742 = vmatprep.subr.mxu0 0.0
    %1743 = vmatpush2.msra.mxu0 0.0
    %1744 = vmatprep.subr.mxu0 0.0
    %1745 = vmatpush2.msra.mxu0 0.0
    %1746 = vmatprep.subr.mxu0 0.0
    %1747 = vmatpush2.msra.mxu0 0.0
    %1748 = vmatprep.subr.mxu0 0.0
    %1749 = vmatpush2.msra.mxu0 0.0
    %1750 = vmatprep.mubr.f32.mxu0 0.0
    %1751 = vmatmul.mubr.f32.gmra.mxu0 %v1669
    %v1752 = vpop.f32.mrf.mxu0
    %v1753 = vadd.f32 0.0, %v1752
    %v1754 = vpop.f32.mrf.mxu0
    %1755 = vmatprep.mubr.f32.mxu0 0.0
    %1756 = vmatmul.mubr.f32.gmra.mxu0 %v1672
    %v1757 = vpop.f32.mrf.mxu0
    %v1758 = vadd.f32 0.0, %v1757
    %v1759 = vpop.f32.mrf.mxu0
    %1760 = vmatprep.mubr.f32.mxu0 0.0
    %1761 = vmatmul.mubr.f32.gmra.mxu0 %v1675
    %v1762 = vpop.f32.mrf.mxu0
    %v1763 = vadd.f32 0.0, %v1762
    %v1764 = vpop.f32.mrf.mxu0
    %1765 = vmatprep.mubr.f32.mxu0 0.0
    %1766 = vmatmul.mubr.f32.gmra.mxu0 %v1678
    %v1767 = vpop.f32.mrf.mxu0
    %v1768 = vadd.f32 0.0, %v1767
    %v1769 = vpop.f32.mrf.mxu0
    %1770 = vmatprep.mubr.f32.mxu0 0.0
    %1771 = vmatmul.mubr.f32.gmra.mxu0 %v1681
    %v1772 = vpop.f32.mrf.mxu0
    %v1773 = vadd.f32 0.0, %v1772
    %v1774 = vpop.f32.mrf.mxu0
    %1775 = vmatprep.mubr.f32.mxu0 0.0
    %1776 = vmatmul.mubr.f32.gmra.mxu0 %v1684
    %v1777 = vpop.f32.mrf.mxu0
    %v1778 = vadd.f32 0.0, %v1777
    %v1779 = vpop.f32.mrf.mxu0
    %1780 = vdwg.mxu0
    %v1782 = vsel %vm1064, %v1652, 0
    %v1785 = vsel %vm1064, %v1654, 0
    %v1788 = vsel %vm1064, %v1656, 0
    %v1791 = vsel %vm1064, %v1658, 0
    %v1794 = vsel %vm1064, %v1660, 0
    %v1797 = vsel %vm1064, %v1662, 0
    %1799 = vmatprep.subr.mxu0 0.0
    %1800 = vmatpush1.msra.mxu0 0.0
    %1801 = vmatprep.subr.mxu0 0.0
    %1802 = vmatpush1.msra.mxu0 0.0
    %1803 = vmatprep.subr.mxu0 0.0
    %1804 = vmatpush1.msra.mxu0 0.0
    %1805 = vmatprep.subr.mxu0 0.0
    %1806 = vmatpush1.msra.mxu0 0.0
    %1807 = vmatprep.subr.mxu0 0.0
    %1808 = vmatpush1.msra.mxu0 0.0
    %1809 = vmatprep.subr.mxu0 0.0
    %1810 = vmatpush1.msra.mxu0 0.0
    %1811 = vmatprep.subr.mxu0 0.0
    %1812 = vmatpush1.msra.mxu0 0.0
    %1813 = vmatprep.subr.mxu0 0.0
    %1814 = vmatpush1.msra.mxu0 0.0
    %1815 = vmatprep.subr.mxu0 0.0
    %1816 = vmatpush1.msra.mxu0 0.0
    %1817 = vmatprep.subr.mxu0 0.0
    %1818 = vmatpush1.msra.mxu0 0.0
    %1819 = vmatprep.subr.mxu0 0.0
    %1820 = vmatpush1.msra.mxu0 0.0
    %1821 = vmatprep.subr.mxu0 0.0
    %1822 = vmatpush1.msra.mxu0 0.0
    %1823 = vmatprep.subr.mxu0 0.0
    %1824 = vmatpush1.msra.mxu0 0.0
    %1825 = vmatprep.subr.mxu0 0.0
    %1826 = vmatpush1.msra.mxu0 0.0
    %1827 = vmatprep.subr.mxu0 0.0
    %1828 = vmatpush1.msra.mxu0 0.0
    %1829 = vmatprep.subr.mxu0 0.0
    %1830 = vmatpush1.msra.mxu0 %v1665
    %1831 = vmatprep.subr.mxu0 0.0
    %1832 = vmatpush2.msra.mxu0 0.0
    %1833 = vmatprep.subr.mxu0 0.0
    %1834 = vmatpush2.msra.mxu0 0.0
    %1835 = vmatprep.subr.mxu0 0.0
    %1836 = vmatpush2.msra.mxu0 0.0
    %1837 = vmatprep.subr.mxu0 0.0
    %1838 = vmatpush2.msra.mxu0 0.0
    %1839 = vmatprep.subr.mxu0 0.0
    %1840 = vmatpush2.msra.mxu0 0.0
    %1841 = vmatprep.subr.mxu0 0.0
    %1842 = vmatpush2.msra.mxu0 0.0
    %1843 = vmatprep.subr.mxu0 0.0
    %1844 = vmatpush2.msra.mxu0 0.0
    %1845 = vmatprep.subr.mxu0 0.0
    %1846 = vmatpush2.msra.mxu0 0.0
    %1847 = vmatprep.subr.mxu0 0.0
    %1848 = vmatpush2.msra.mxu0 0.0
    %1849 = vmatprep.subr.mxu0 0.0
    %1850 = vmatpush2.msra.mxu0 0.0
    %1851 = vmatprep.subr.mxu0 0.0
    %1852 = vmatpush2.msra.mxu0 0.0
    %1853 = vmatprep.subr.mxu0 0.0
    %1854 = vmatpush2.msra.mxu0 0.0
    %1855 = vmatprep.subr.mxu0 0.0
    %1856 = vmatpush2.msra.mxu0 0.0
    %1857 = vmatprep.subr.mxu0 0.0
    %1858 = vmatpush2.msra.mxu0 0.0
    %1859 = vmatprep.subr.mxu0 0.0
    %1860 = vmatpush2.msra.mxu0 0.0
    %1861 = vmatprep.subr.mxu0 0.0
    %1862 = vmatpush2.msra.mxu0 0.0
    %1863 = vmatprep.mubr.f32.mxu0 0.0
    %1864 = vmatmul.mubr.f32.gmra.mxu0 %v1782
    %v1865 = vpop.f32.mrf.mxu0
    %v1866 = vadd.f32 %v1753, %v1865
    %v1867 = vpop.f32.mrf.mxu0
    %1868 = vmatprep.mubr.f32.mxu0 0.0
    %1869 = vmatmul.mubr.f32.gmra.mxu0 %v1785
    %v1870 = vpop.f32.mrf.mxu0
    %v1871 = vadd.f32 %v1758, %v1870
    %v1872 = vpop.f32.mrf.mxu0
    %1873 = vmatprep.mubr.f32.mxu0 0.0
    %1874 = vmatmul.mubr.f32.gmra.mxu0 %v1788
    %v1875 = vpop.f32.mrf.mxu0
    %v1876 = vadd.f32 %v1763, %v1875
    %v1877 = vpop.f32.mrf.mxu0
    %1878 = vmatprep.mubr.f32.mxu0 0.0
    %1879 = vmatmul.mubr.f32.gmra.mxu0 %v1791
    %v1880 = vpop.f32.mrf.mxu0
    %v1881 = vadd.f32 %v1768, %v1880
    %v1882 = vpop.f32.mrf.mxu0
    %1883 = vmatprep.mubr.f32.mxu0 0.0
    %1884 = vmatmul.mubr.f32.gmra.mxu0 %v1794
    %v1885 = vpop.f32.mrf.mxu0
    %v1886 = vadd.f32 %v1773, %v1885
    %v1887 = vpop.f32.mrf.mxu0
    %1888 = vmatprep.mubr.f32.mxu0 0.0
    %1889 = vmatmul.mubr.f32.gmra.mxu0 %v1797
    %v1890 = vpop.f32.mrf.mxu0
    %v1891 = vadd.f32 %v1778, %v1890
    %v1892 = vpop.f32.mrf.mxu0
    %1893 = vdwg.mxu0
    %v1895 = vsel %vm1064, %v1664, 0
    %1897 = vmatprep.subr.mxu0 0.0
    %1898 = vmatpush1.msra.mxu0 0.0
    %1899 = vmatprep.subr.mxu0 0.0
    %1900 = vmatpush1.msra.mxu0 0.0
    %1901 = vmatprep.subr.mxu0 0.0
    %1902 = vmatpush1.msra.mxu0 0.0
    %1903 = vmatprep.subr.mxu0 0.0
    %1904 = vmatpush1.msra.mxu0 0.0
    %1905 = vmatprep.subr.mxu0 0.0
    %1906 = vmatpush1.msra.mxu0 0.0
    %1907 = vmatprep.subr.mxu0 0.0
    %1908 = vmatpush1.msra.mxu0 0.0
    %1909 = vmatprep.subr.mxu0 0.0
    %1910 = vmatpush1.msra.mxu0 0.0
    %1911 = vmatprep.subr.mxu0 0.0
    %1912 = vmatpush1.msra.mxu0 0.0
    %1913 = vmatprep.subr.mxu0 0.0
    %1914 = vmatpush1.msra.mxu0 0.0
    %1915 = vmatprep.subr.mxu0 0.0
    %1916 = vmatpush1.msra.mxu0 0.0
    %1917 = vmatprep.subr.mxu0 0.0
    %1918 = vmatpush1.msra.mxu0 0.0
    %1919 = vmatprep.subr.mxu0 0.0
    %1920 = vmatpush1.msra.mxu0 0.0
    %1921 = vmatprep.subr.mxu0 0.0
    %1922 = vmatpush1.msra.mxu0 0.0
    %1923 = vmatprep.subr.mxu0 0.0
    %1924 = vmatpush1.msra.mxu0 0.0
    %1925 = vmatprep.subr.mxu0 0.0
    %1926 = vmatpush1.msra.mxu0 0.0
    %1927 = vmatprep.subr.mxu0 0.0
    %1928 = vmatpush1.msra.mxu0 %v1667
    %1929 = vmatprep.subr.mxu0 0.0
    %1930 = vmatpush2.msra.mxu0 0.0
    %1931 = vmatprep.subr.mxu0 0.0
    %1932 = vmatpush2.msra.mxu0 0.0
    %1933 = vmatprep.subr.mxu0 0.0
    %1934 = vmatpush2.msra.mxu0 0.0
    %1935 = vmatprep.subr.mxu0 0.0
    %1936 = vmatpush2.msra.mxu0 0.0
    %1937 = vmatprep.subr.mxu0 0.0
    %1938 = vmatpush2.msra.mxu0 0.0
    %1939 = vmatprep.subr.mxu0 0.0
    %1940 = vmatpush2.msra.mxu0 0.0
    %1941 = vmatprep.subr.mxu0 0.0
    %1942 = vmatpush2.msra.mxu0 0.0
    %1943 = vmatprep.subr.mxu0 0.0
    %1944 = vmatpush2.msra.mxu0 0.0
    %1945 = vmatprep.subr.mxu0 0.0
    %1946 = vmatpush2.msra.mxu0 0.0
    %1947 = vmatprep.subr.mxu0 0.0
    %1948 = vmatpush2.msra.mxu0 0.0
    %1949 = vmatprep.subr.mxu0 0.0
    %1950 = vmatpush2.msra.mxu0 0.0
    %1951 = vmatprep.subr.mxu0 0.0
    %1952 = vmatpush2.msra.mxu0 0.0
    %1953 = vmatprep.subr.mxu0 0.0
    %1954 = vmatpush2.msra.mxu0 0.0
    %1955 = vmatprep.subr.mxu0 0.0
    %1956 = vmatpush2.msra.mxu0 0.0
    %1957 = vmatprep.subr.mxu0 0.0
    %1958 = vmatpush2.msra.mxu0 0.0
    %1959 = vmatprep.subr.mxu0 0.0
    %1960 = vmatpush2.msra.mxu0 0.0
    %1961 = vmatprep.mubr.f32.mxu0 0.0
    %1962 = vmatmul.mubr.f32.gmra.mxu0 %v1785
    %v1963 = vpop.f32.mrf.mxu0
    %v1964 = vadd.f32 0.0, %v1963
    %v1965 = vpop.f32.mrf.mxu0
    %1966 = vmatprep.mubr.f32.mxu0 0.0
    %1967 = vmatmul.mubr.f32.gmra.mxu0 %v1788
    %v1968 = vpop.f32.mrf.mxu0
    %v1969 = vadd.f32 0.0, %v1968
    %v1970 = vpop.f32.mrf.mxu0
    %1971 = vmatprep.mubr.f32.mxu0 0.0
    %1972 = vmatmul.mubr.f32.gmra.mxu0 %v1791
    %v1973 = vpop.f32.mrf.mxu0
    %v1974 = vadd.f32 0.0, %v1973
    %v1975 = vpop.f32.mrf.mxu0
    %1976 = vmatprep.mubr.f32.mxu0 0.0
    %1977 = vmatmul.mubr.f32.gmra.mxu0 %v1794
    %v1978 = vpop.f32.mrf.mxu0
    %v1979 = vadd.f32 0.0, %v1978
    %v1980 = vpop.f32.mrf.mxu0
    %1981 = vmatprep.mubr.f32.mxu0 0.0
    %1982 = vmatmul.mubr.f32.gmra.mxu0 %v1797
    %v1983 = vpop.f32.mrf.mxu0
    %v1984 = vadd.f32 0.0, %v1983
    %v1985 = vpop.f32.mrf.mxu0
    %1986 = vmatprep.mubr.f32.mxu0 0.0
    %1987 = vmatmul.mubr.f32.gmra.mxu0 %v1895
    %v1988 = vpop.f32.mrf.mxu0
    %v1989 = vadd.f32 0.0, %v1988
    %v1990 = vpop.f32.mrf.mxu0
    %1991 = vdwg.mxu0
    %v1992 = vadd.f32 %v1866, %v1964
    %v1993 = vadd.f32 %v1871, %v1969
    %v1994 = vadd.f32 %v1876, %v1974
    %v1995 = vadd.f32 %v1881, %v1979
    %v1996 = vadd.f32 %v1886, %v1984
    %v1997 = vadd.f32 %v1891, %v1989
    %v1998 = vld [vmem:[%s6] sm:$0x1]
    %v2000 = vlaneseq
    %v2001 = vshrl.u32 %v2000, 7
    %v2002 = vsub.s32 0, %v2001
    %v2003 = vrot.slane %v1998, %v2002
    %v2005 = vadd.f32 %v1992, %v2003
    %v2006 = vadd.f32 %v1993, %v2003
    %v2007 = vadd.f32 %v1994, %v2003
    %v2008 = vadd.f32 %v1995, %v2003
    %v2009 = vadd.f32 %v1996, %v2003
    %v2010 = vadd.f32 %v1997, %v2003
    %vm2011 = vcmp.gt.f32.partialorder %v2005, 0.0
    %vm2012 = vcmp.gt.f32.partialorder %v2006, 0.0
    %vm2013 = vcmp.gt.f32.partialorder %v2007, 0.0
    %vm2014 = vcmp.gt.f32.partialorder %v2008, 0.0
    %vm2015 = vcmp.gt.f32.partialorder %v2009, 0.0
    %vm2016 = vcmp.gt.f32.partialorder %v2010, 0.0
    %v2017 = vmin.f32 %v2005, 0.0
    %v2018 = vmin.f32 %v2006, 0.0
    %v2019 = vmin.f32 %v2007, 0.0
    %v2020 = vmin.f32 %v2008, 0.0
    %v2021 = vmin.f32 %v2009, 0.0
    %v2022 = vmin.f32 %v2010, 0.0
    %v2023 = vmul.f32 %v2017, 1.442695
    %v2024 = vpow.pop %v2023
    %v2025 = vmul.f32 %v2018, 1.442695
    %v2026 = vpow.pop %v2025
    %v2027 = vmul.f32 %v2019, 1.442695
    %v2028 = vpow.pop %v2027
    %v2029 = vmul.f32 %v2020, 1.442695
    %v2030 = vpow.pop %v2029
    %v2031 = vmul.f32 %v2021, 1.442695
    %v2032 = vpow.pop %v2031
    %v2033 = vmul.f32 %v2022, 1.442695
    %v2034 = vpow.pop %v2033
    %v2035 = vsub.f32 %v2024, 1.0
    %v2036 = vsub.f32 %v2026, 1.0
    %v2037 = vsub.f32 %v2028, 1.0
    %v2038 = vsub.f32 %v2030, 1.0
    %v2039 = vsub.f32 %v2032, 1.0
    %v2040 = vsub.f32 %v2034, 1.0
    %v2041 = vsel %vm2011, %v2005, %v2035
    %v2042 = vsel %vm2012, %v2006, %v2036
    %v2043 = vsel %vm2013, %v2007, %v2037
    %v2044 = vsel %vm2014, %v2008, %v2038
    %v2045 = vsel %vm2015, %v2009, %v2039
    %v2046 = vsel %vm2016, %v2010, %v2040
    %v2047 = vld [vmem:[%s7] sm:$0xff]
    %v2048 = vld [vmem:[%s7 + $0x8] sm:$0xff]
    %v2049 = vld [vmem:[%s7 + $0x10] sm:$0xff]
    %v2051 = vsel %vm1064, %v2042, 0
    %v2054 = vsel %vm1064, %v2043, 0
    %v2057 = vsel %vm1064, %v2044, 0
    %v2060 = vsel %vm1064, %v2045, 0
    %2062 = vmatprep.subr.mxu0 0.0
    %2063 = vmatpush1.msra.mxu0 0.0
    %2064 = vmatprep.subr.mxu0 0.0
    %2065 = vmatpush1.msra.mxu0 0.0
    %2066 = vmatprep.subr.mxu0 0.0
    %2067 = vmatpush1.msra.mxu0 0.0
    %2068 = vmatprep.subr.mxu0 0.0
    %2069 = vmatpush1.msra.mxu0 0.0
    %2070 = vmatprep.subr.mxu0 0.0
    %2071 = vmatpush1.msra.mxu0 0.0
    %2072 = vmatprep.subr.mxu0 0.0
    %2073 = vmatpush1.msra.mxu0 0.0
    %2074 = vmatprep.subr.mxu0 0.0
    %2075 = vmatpush1.msra.mxu0 0.0
    %2076 = vmatprep.subr.mxu0 0.0
    %2077 = vmatpush1.msra.mxu0 0.0
    %2078 = vmatprep.subr.mxu0 0.0
    %2079 = vmatpush1.msra.mxu0 0.0
    %2080 = vmatprep.subr.mxu0 0.0
    %2081 = vmatpush1.msra.mxu0 0.0
    %2082 = vmatprep.subr.mxu0 0.0
    %2083 = vmatpush1.msra.mxu0 0.0
    %2084 = vmatprep.subr.mxu0 0.0
    %2085 = vmatpush1.msra.mxu0 0.0
    %2086 = vmatprep.subr.mxu0 0.0
    %2087 = vmatpush1.msra.mxu0 0.0
    %2088 = vmatprep.subr.mxu0 0.0
    %2089 = vmatpush1.msra.mxu0 0.0
    %2090 = vmatprep.subr.mxu0 0.0
    %2091 = vmatpush1.msra.mxu0 0.0
    %2092 = vmatprep.subr.mxu0 0.0
    %2093 = vmatpush1.msra.mxu0 %v2048
    %2094 = vmatprep.subr.mxu0 0.0
    %2095 = vmatpush2.msra.mxu0 0.0
    %2096 = vmatprep.subr.mxu0 0.0
    %2097 = vmatpush2.msra.mxu0 0.0
    %2098 = vmatprep.subr.mxu0 0.0
    %2099 = vmatpush2.msra.mxu0 0.0
    %2100 = vmatprep.subr.mxu0 0.0
    %2101 = vmatpush2.msra.mxu0 0.0
    %2102 = vmatprep.subr.mxu0 0.0
    %2103 = vmatpush2.msra.mxu0 0.0
    %2104 = vmatprep.subr.mxu0 0.0
    %2105 = vmatpush2.msra.mxu0 0.0
    %2106 = vmatprep.subr.mxu0 0.0
    %2107 = vmatpush2.msra.mxu0 0.0
    %2108 = vmatprep.subr.mxu0 0.0
    %2109 = vmatpush2.msra.mxu0 0.0
    %2110 = vmatprep.subr.mxu0 0.0
    %2111 = vmatpush2.msra.mxu0 0.0
    %2112 = vmatprep.subr.mxu0 0.0
    %2113 = vmatpush2.msra.mxu0 0.0
    %2114 = vmatprep.subr.mxu0 0.0
    %2115 = vmatpush2.msra.mxu0 0.0
    %2116 = vmatprep.subr.mxu0 0.0
    %2117 = vmatpush2.msra.mxu0 0.0
    %2118 = vmatprep.subr.mxu0 0.0
    %2119 = vmatpush2.msra.mxu0 0.0
    %2120 = vmatprep.subr.mxu0 0.0
    %2121 = vmatpush2.msra.mxu0 0.0
    %2122 = vmatprep.subr.mxu0 0.0
    %2123 = vmatpush2.msra.mxu0 0.0
    %2124 = vmatprep.subr.mxu0 0.0
    %2125 = vmatpush2.msra.mxu0 0.0
    %2126 = vmatprep.mubr.f32.mxu0 0.0
    %2127 = vmatmul.mubr.f32.gmra.mxu0 %v2051
    %v2128 = vpop.f32.mrf.mxu0
    %v2129 = vadd.f32 0.0, %v2128
    %v2130 = vpop.f32.mrf.mxu0
    %2131 = vmatprep.mubr.f32.mxu0 0.0
    %2132 = vmatmul.mubr.f32.gmra.mxu0 %v2054
    %v2133 = vpop.f32.mrf.mxu0
    %v2134 = vadd.f32 0.0, %v2133
    %v2135 = vpop.f32.mrf.mxu0
    %2136 = vmatprep.mubr.f32.mxu0 0.0
    %2137 = vmatmul.mubr.f32.gmra.mxu0 %v2057
    %v2138 = vpop.f32.mrf.mxu0
    %v2139 = vadd.f32 0.0, %v2138
    %v2140 = vpop.f32.mrf.mxu0
    %2141 = vmatprep.mubr.f32.mxu0 0.0
    %2142 = vmatmul.mubr.f32.gmra.mxu0 %v2060
    %v2143 = vpop.f32.mrf.mxu0
    %v2144 = vadd.f32 0.0, %v2143
    %v2145 = vpop.f32.mrf.mxu0
    %2146 = vdwg.mxu0
    %v2148 = vsel %vm1064, %v2041, 0
    %2150 = vmatprep.subr.mxu0 0.0
    %2151 = vmatpush1.msra.mxu0 0.0
    %2152 = vmatprep.subr.mxu0 0.0
    %2153 = vmatpush1.msra.mxu0 0.0
    %2154 = vmatprep.subr.mxu0 0.0
    %2155 = vmatpush1.msra.mxu0 0.0
    %2156 = vmatprep.subr.mxu0 0.0
    %2157 = vmatpush1.msra.mxu0 0.0
    %2158 = vmatprep.subr.mxu0 0.0
    %2159 = vmatpush1.msra.mxu0 0.0
    %2160 = vmatprep.subr.mxu0 0.0
    %2161 = vmatpush1.msra.mxu0 0.0
    %2162 = vmatprep.subr.mxu0 0.0
    %2163 = vmatpush1.msra.mxu0 0.0
    %2164 = vmatprep.subr.mxu0 0.0
    %2165 = vmatpush1.msra.mxu0 0.0
    %2166 = vmatprep.subr.mxu0 0.0
    %2167 = vmatpush1.msra.mxu0 0.0
    %2168 = vmatprep.subr.mxu0 0.0
    %2169 = vmatpush1.msra.mxu0 0.0
    %2170 = vmatprep.subr.mxu0 0.0
    %2171 = vmatpush1.msra.mxu0 0.0
    %2172 = vmatprep.subr.mxu0 0.0
    %2173 = vmatpush1.msra.mxu0 0.0
    %2174 = vmatprep.subr.mxu0 0.0
    %2175 = vmatpush1.msra.mxu0 0.0
    %2176 = vmatprep.subr.mxu0 0.0
    %2177 = vmatpush1.msra.mxu0 0.0
    %2178 = vmatprep.subr.mxu0 0.0
    %2179 = vmatpush1.msra.mxu0 0.0
    %2180 = vmatprep.subr.mxu0 0.0
    %2181 = vmatpush1.msra.mxu0 %v2047
    %2182 = vmatprep.subr.mxu0 0.0
    %2183 = vmatpush2.msra.mxu0 0.0
    %2184 = vmatprep.subr.mxu0 0.0
    %2185 = vmatpush2.msra.mxu0 0.0
    %2186 = vmatprep.subr.mxu0 0.0
    %2187 = vmatpush2.msra.mxu0 0.0
    %2188 = vmatprep.subr.mxu0 0.0
    %2189 = vmatpush2.msra.mxu0 0.0
    %2190 = vmatprep.subr.mxu0 0.0
    %2191 = vmatpush2.msra.mxu0 0.0
    %2192 = vmatprep.subr.mxu0 0.0
    %2193 = vmatpush2.msra.mxu0 0.0
    %2194 = vmatprep.subr.mxu0 0.0
    %2195 = vmatpush2.msra.mxu0 0.0
    %2196 = vmatprep.subr.mxu0 0.0
    %2197 = vmatpush2.msra.mxu0 0.0
    %2198 = vmatprep.subr.mxu0 0.0
    %2199 = vmatpush2.msra.mxu0 0.0
    %2200 = vmatprep.subr.mxu0 0.0
    %2201 = vmatpush2.msra.mxu0 0.0
    %2202 = vmatprep.subr.mxu0 0.0
    %2203 = vmatpush2.msra.mxu0 0.0
    %2204 = vmatprep.subr.mxu0 0.0
    %2205 = vmatpush2.msra.mxu0 0.0
    %2206 = vmatprep.subr.mxu0 0.0
    %2207 = vmatpush2.msra.mxu0 0.0
    %2208 = vmatprep.subr.mxu0 0.0
    %2209 = vmatpush2.msra.mxu0 0.0
    %2210 = vmatprep.subr.mxu0 0.0
    %2211 = vmatpush2.msra.mxu0 0.0
    %2212 = vmatprep.subr.mxu0 0.0
    %2213 = vmatpush2.msra.mxu0 0.0
    %2214 = vmatprep.mubr.f32.mxu0 0.0
    %2215 = vmatmul.mubr.f32.gmra.mxu0 %v2148
    %v2216 = vpop.f32.mrf.mxu0
    %v2217 = vadd.f32 %v2129, %v2216
    %v2218 = vpop.f32.mrf.mxu0
    %2219 = vmatprep.mubr.f32.mxu0 0.0
    %2220 = vmatmul.mubr.f32.gmra.mxu0 %v2051
    %v2221 = vpop.f32.mrf.mxu0
    %v2222 = vadd.f32 %v2134, %v2221
    %v2223 = vpop.f32.mrf.mxu0
    %2224 = vmatprep.mubr.f32.mxu0 0.0
    %2225 = vmatmul.mubr.f32.gmra.mxu0 %v2054
    %v2226 = vpop.f32.mrf.mxu0
    %v2227 = vadd.f32 %v2139, %v2226
    %v2228 = vpop.f32.mrf.mxu0
    %2229 = vmatprep.mubr.f32.mxu0 0.0
    %2230 = vmatmul.mubr.f32.gmra.mxu0 %v2057
    %v2231 = vpop.f32.mrf.mxu0
    %v2232 = vadd.f32 %v2144, %v2231
    %v2233 = vpop.f32.mrf.mxu0
    %2234 = vdwg.mxu0
    %v2236 = vsel %vm1064, %v2046, 0
    %2238 = vmatprep.subr.mxu0 0.0
    %2239 = vmatpush1.msra.mxu0 0.0
    %2240 = vmatprep.subr.mxu0 0.0
    %2241 = vmatpush1.msra.mxu0 0.0
    %2242 = vmatprep.subr.mxu0 0.0
    %2243 = vmatpush1.msra.mxu0 0.0
    %2244 = vmatprep.subr.mxu0 0.0
    %2245 = vmatpush1.msra.mxu0 0.0
    %2246 = vmatprep.subr.mxu0 0.0
    %2247 = vmatpush1.msra.mxu0 0.0
    %2248 = vmatprep.subr.mxu0 0.0
    %2249 = vmatpush1.msra.mxu0 0.0
    %2250 = vmatprep.subr.mxu0 0.0
    %2251 = vmatpush1.msra.mxu0 0.0
    %2252 = vmatprep.subr.mxu0 0.0
    %2253 = vmatpush1.msra.mxu0 0.0
    %2254 = vmatprep.subr.mxu0 0.0
    %2255 = vmatpush1.msra.mxu0 0.0
    %2256 = vmatprep.subr.mxu0 0.0
    %2257 = vmatpush1.msra.mxu0 0.0
    %2258 = vmatprep.subr.mxu0 0.0
    %2259 = vmatpush1.msra.mxu0 0.0
    %2260 = vmatprep.subr.mxu0 0.0
    %2261 = vmatpush1.msra.mxu0 0.0
    %2262 = vmatprep.subr.mxu0 0.0
    %2263 = vmatpush1.msra.mxu0 0.0
    %2264 = vmatprep.subr.mxu0 0.0
    %2265 = vmatpush1.msra.mxu0 0.0
    %2266 = vmatprep.subr.mxu0 0.0
    %2267 = vmatpush1.msra.mxu0 0.0
    %2268 = vmatprep.subr.mxu0 0.0
    %2269 = vmatpush1.msra.mxu0 %v2049
    %2270 = vmatprep.subr.mxu0 0.0
    %2271 = vmatpush2.msra.mxu0 0.0
    %2272 = vmatprep.subr.mxu0 0.0
    %2273 = vmatpush2.msra.mxu0 0.0
    %2274 = vmatprep.subr.mxu0 0.0
    %2275 = vmatpush2.msra.mxu0 0.0
    %2276 = vmatprep.subr.mxu0 0.0
    %2277 = vmatpush2.msra.mxu0 0.0
    %2278 = vmatprep.subr.mxu0 0.0
    %2279 = vmatpush2.msra.mxu0 0.0
    %2280 = vmatprep.subr.mxu0 0.0
    %2281 = vmatpush2.msra.mxu0 0.0
    %2282 = vmatprep.subr.mxu0 0.0
    %2283 = vmatpush2.msra.mxu0 0.0
    %2284 = vmatprep.subr.mxu0 0.0
    %2285 = vmatpush2.msra.mxu0 0.0
    %2286 = vmatprep.subr.mxu0 0.0
    %2287 = vmatpush2.msra.mxu0 0.0
    %2288 = vmatprep.subr.mxu0 0.0
    %2289 = vmatpush2.msra.mxu0 0.0
    %2290 = vmatprep.subr.mxu0 0.0
    %2291 = vmatpush2.msra.mxu0 0.0
    %2292 = vmatprep.subr.mxu0 0.0
    %2293 = vmatpush2.msra.mxu0 0.0
    %2294 = vmatprep.subr.mxu0 0.0
    %2295 = vmatpush2.msra.mxu0 0.0
    %2296 = vmatprep.subr.mxu0 0.0
    %2297 = vmatpush2.msra.mxu0 0.0
    %2298 = vmatprep.subr.mxu0 0.0
    %2299 = vmatpush2.msra.mxu0 0.0
    %2300 = vmatprep.subr.mxu0 0.0
    %2301 = vmatpush2.msra.mxu0 0.0
    %2302 = vmatprep.mubr.f32.mxu0 0.0
    %2303 = vmatmul.mubr.f32.gmra.mxu0 %v2054
    %v2304 = vpop.f32.mrf.mxu0
    %v2305 = vadd.f32 0.0, %v2304
    %v2306 = vpop.f32.mrf.mxu0
    %2307 = vmatprep.mubr.f32.mxu0 0.0
    %2308 = vmatmul.mubr.f32.gmra.mxu0 %v2057
    %v2309 = vpop.f32.mrf.mxu0
    %v2310 = vadd.f32 0.0, %v2309
    %v2311 = vpop.f32.mrf.mxu0
    %2312 = vmatprep.mubr.f32.mxu0 0.0
    %2313 = vmatmul.mubr.f32.gmra.mxu0 %v2060
    %v2314 = vpop.f32.mrf.mxu0
    %v2315 = vadd.f32 0.0, %v2314
    %v2316 = vpop.f32.mrf.mxu0
    %2317 = vmatprep.mubr.f32.mxu0 0.0
    %2318 = vmatmul.mubr.f32.gmra.mxu0 %v2236
    %v2319 = vpop.f32.mrf.mxu0
    %v2320 = vadd.f32 0.0, %v2319
    %v2321 = vpop.f32.mrf.mxu0
    %2322 = vdwg.mxu0
    %v2323 = vadd.f32 %v2217, %v2305
    %v2324 = vadd.f32 %v2222, %v2310
    %v2325 = vadd.f32 %v2227, %v2315
    %v2326 = vadd.f32 %v2232, %v2320
    %v2327 = vld [vmem:[%s8] sm:$0x1]
    %v2329 = vlaneseq
    %v2330 = vshrl.u32 %v2329, 7
    %v2331 = vsub.s32 0, %v2330
    %v2332 = vrot.slane %v2327, %v2331
    %v2334 = vadd.f32 %v2323, %v2332
    %v2335 = vadd.f32 %v2324, %v2332
    %v2336 = vadd.f32 %v2325, %v2332
    %v2337 = vadd.f32 %v2326, %v2332
    %vm2338 = vcmp.gt.f32.partialorder %v2334, 0.0
    %vm2339 = vcmp.gt.f32.partialorder %v2335, 0.0
    %vm2340 = vcmp.gt.f32.partialorder %v2336, 0.0
    %vm2341 = vcmp.gt.f32.partialorder %v2337, 0.0
    %v2342 = vmin.f32 %v2334, 0.0
    %v2343 = vmin.f32 %v2335, 0.0
    %v2344 = vmin.f32 %v2336, 0.0
    %v2345 = vmin.f32 %v2337, 0.0
    %v2346 = vmul.f32 %v2342, 1.442695
    %v2347 = vpow.pop %v2346
    %v2348 = vmul.f32 %v2343, 1.442695
    %v2349 = vpow.pop %v2348
    %v2350 = vmul.f32 %v2344, 1.442695
    %v2351 = vpow.pop %v2350
    %v2352 = vmul.f32 %v2345, 1.442695
    %v2353 = vpow.pop %v2352
    %v2354 = vsub.f32 %v2347, 1.0
    %v2355 = vsub.f32 %v2349, 1.0
    %v2356 = vsub.f32 %v2351, 1.0
    %v2357 = vsub.f32 %v2353, 1.0
    %v2358 = vsel %vm2338, %v2334, %v2354
    %v2359 = vsel %vm2339, %v2335, %v2355
    %v2360 = vsel %vm2340, %v2336, %v2356
    %v2361 = vsel %vm2341, %v2337, %v2357
    %v2362 = vsel %vm1064, %v2358, 0.0
    %v2363 = vsel %vm1064, %v2359, 0.0
    %v2364 = vadd.f32 %v2362, %v2363
    %v2365 = vsel %vm1064, %v2360, 0.0
    %v2366 = vadd.f32 %v2364, %v2365
    %v2367 = vsel %vm1064, %v2361, 0.0
    %v2368 = vadd.f32 %v2366, %v2367
    %v2369 = vrcp.pop 4.0
    %v2370 = vmul.f32 %v2368, %v2369
    %v2371 = vld [vmem:[%s9] sm:$0xff]
    %v2372 = vld [vmem:[%s9 + $0x8] sm:$0xff]
    %v2373 = vld [vmem:[%s9 + $0x10] sm:$0xff]
    %v2374 = vld [vmem:[%s9 + $0x18] sm:$0xff]
    %v2375 = vld [vmem:[%s10] sm:$0xff]
    %v2376 = vld [vmem:[%s10 + $0x8] sm:$0xff]
    %v2377 = vld [vmem:[%s10 + $0x10] sm:$0xff]
    %v2378 = vld [vmem:[%s10 + $0x18] sm:$0xff]
    %2380 = vset.pattern.permute.xlu0 0
    %2381 = vperm.xlu0 %2380, %v2375
    %v2382 = vpop.permute.xlu0 %2381
    %2385 = vset.pattern.permute.xlu0 0
    %2386 = vperm.xlu0 %2385, %v2376
    %v2387 = vpop.permute.xlu0 %2386
    %2390 = vset.pattern.permute.xlu0 0
    %2391 = vperm.xlu0 %2390, %v2377
    %v2392 = vpop.permute.xlu0 %2391
    %2395 = vset.pattern.permute.xlu0 0
    %2396 = vperm.xlu0 %2395, %v2378
    %v2397 = vpop.permute.xlu0 %2396
    %v2400 = vsel %vm1064, %v2371, 0
    %v2403 = vsel %vm1064, %v2372, 0
    %v2406 = vsel %vm1064, %v2373, 0
    %v2409 = vsel %vm1064, %v2374, 0
    %v2412 = vsel %vm1064, %v2370, 0
    %2414 = vmatprep.subr.mxu0 0.0
    %2415 = vmatpush1.xpose.msra.mxu0 0.0
    %2416 = vmatprep.subr.mxu0 0.0
    %2417 = vmatpush1.xpose.msra.mxu0 0.0
    %2418 = vmatprep.subr.mxu0 0.0
    %2419 = vmatpush1.xpose.msra.mxu0 0.0
    %2420 = vmatprep.subr.mxu0 0.0
    %2421 = vmatpush1.xpose.msra.mxu0 0.0
    %2422 = vmatprep.subr.mxu0 0.0
    %2423 = vmatpush1.xpose.msra.mxu0 0.0
    %2424 = vmatprep.subr.mxu0 0.0
    %2425 = vmatpush1.xpose.msra.mxu0 0.0
    %2426 = vmatprep.subr.mxu0 0.0
    %2427 = vmatpush1.xpose.msra.mxu0 0.0
    %2428 = vmatprep.subr.mxu0 0.0
    %2429 = vmatpush1.xpose.msra.mxu0 0.0
    %2430 = vmatprep.subr.mxu0 0.0
    %2431 = vmatpush1.xpose.msra.mxu0 0.0
    %2432 = vmatprep.subr.mxu0 0.0
    %2433 = vmatpush1.xpose.msra.mxu0 0.0
    %2434 = vmatprep.subr.mxu0 0.0
    %2435 = vmatpush1.xpose.msra.mxu0 0.0
    %2436 = vmatprep.subr.mxu0 0.0
    %2437 = vmatpush1.xpose.msra.mxu0 0.0
    %2438 = vmatprep.subr.mxu0 0.0
    %2439 = vmatpush1.xpose.msra.mxu0 0.0
    %2440 = vmatprep.subr.mxu0 0.0
    %2441 = vmatpush1.xpose.msra.mxu0 0.0
    %2442 = vmatprep.subr.mxu0 0.0
    %2443 = vmatpush1.xpose.msra.mxu0 0.0
    %2444 = vmatprep.subr.mxu0 0.0
    %2445 = vmatpush1.xpose.msra.mxu0 %v2412
    %2446 = vmatprep.subr.mxu0 0.0
    %2447 = vmatpush2.xpose.msra.mxu0 0.0
    %2448 = vmatprep.subr.mxu0 0.0
    %2449 = vmatpush2.xpose.msra.mxu0 0.0
    %2450 = vmatprep.subr.mxu0 0.0
    %2451 = vmatpush2.xpose.msra.mxu0 0.0
    %2452 = vmatprep.subr.mxu0 0.0
    %2453 = vmatpush2.xpose.msra.mxu0 0.0
    %2454 = vmatprep.subr.mxu0 0.0
    %2455 = vmatpush2.xpose.msra.mxu0 0.0
    %2456 = vmatprep.subr.mxu0 0.0
    %2457 = vmatpush2.xpose.msra.mxu0 0.0
    %2458 = vmatprep.subr.mxu0 0.0
    %2459 = vmatpush2.xpose.msra.mxu0 0.0
    %2460 = vmatprep.subr.mxu0 0.0
    %2461 = vmatpush2.xpose.msra.mxu0 0.0
    %2462 = vmatprep.subr.mxu0 0.0
    %2463 = vmatpush2.xpose.msra.mxu0 0.0
    %2464 = vmatprep.subr.mxu0 0.0
    %2465 = vmatpush2.xpose.msra.mxu0 0.0
    %2466 = vmatprep.subr.mxu0 0.0
    %2467 = vmatpush2.xpose.msra.mxu0 0.0
    %2468 = vmatprep.subr.mxu0 0.0
    %2469 = vmatpush2.xpose.msra.mxu0 0.0
    %2470 = vmatprep.subr.mxu0 0.0
    %2471 = vmatpush2.xpose.msra.mxu0 0.0
    %2472 = vmatprep.subr.mxu0 0.0
    %2473 = vmatpush2.xpose.msra.mxu0 0.0
    %2474 = vmatprep.subr.mxu0 0.0
    %2475 = vmatpush2.xpose.msra.mxu0 0.0
    %2476 = vmatprep.subr.mxu0 0.0
    %2477 = vmatpush2.xpose.msra.mxu0 0.0
    %2478 = vmatprep.mubr.f32.mxu0 0.0
    %2479 = vmatmul.mubr.f32.gmra.mxu0 %v2400
    %v2480 = vpop.f32.mrf.mxu0
    %v2481 = vadd.f32 %v2382, %v2480
    %v2482 = vpop.f32.mrf.mxu0
    %2483 = vmatprep.mubr.f32.mxu0 0.0
    %2484 = vmatmul.mubr.f32.gmra.mxu0 %v2403
    %v2485 = vpop.f32.mrf.mxu0
    %v2486 = vadd.f32 %v2387, %v2485
    %v2487 = vpop.f32.mrf.mxu0
    %2488 = vmatprep.mubr.f32.mxu0 0.0
    %2489 = vmatmul.mubr.f32.gmra.mxu0 %v2406
    %v2490 = vpop.f32.mrf.mxu0
    %v2491 = vadd.f32 %v2392, %v2490
    %v2492 = vpop.f32.mrf.mxu0
    %2493 = vmatprep.mubr.f32.mxu0 0.0
    %2494 = vmatmul.mubr.f32.gmra.mxu0 %v2409
    %v2495 = vpop.f32.mrf.mxu0
    %v2496 = vadd.f32 %v2397, %v2495
    %v2497 = vpop.f32.mrf.mxu0
    %2498 = vdwg.mxu0
    %v2499 = vmax.f32 %v2481, 0.0
    %v2500 = vmax.f32 %v2486, 0.0
    %v2501 = vmax.f32 %v2491, 0.0
    %v2502 = vmax.f32 %v2496, 0.0
    %v2503 = vld [vmem:[%s11] sm:$0xf]
    %v2504 = vld [vmem:[%s12] sm:$0xf]
    %2506 = vset.pattern.permute.xlu0 0
    %2507 = vperm.xlu0 %2506, %v2504
    %v2508 = vpop.permute.xlu0 %2507
    %vm2510 = vcmask 261120
    %v2512 = vsel %vm2510, %v2503, 0
    %2514 = vmatprep.subr.mxu0 0.0
    %2515 = vmatpush1.msra.mxu0 0.0
    %2516 = vmatprep.subr.mxu0 0.0
    %2517 = vmatpush1.msra.mxu0 0.0
    %2518 = vmatprep.subr.mxu0 0.0
    %2519 = vmatpush1.msra.mxu0 0.0
    %2520 = vmatprep.subr.mxu0 0.0
    %2521 = vmatpush1.msra.mxu0 0.0
    %2522 = vmatprep.subr.mxu0 0.0
    %2523 = vmatpush1.msra.mxu0 0.0
    %2524 = vmatprep.subr.mxu0 0.0
    %2525 = vmatpush1.msra.mxu0 0.0
    %2526 = vmatprep.subr.mxu0 0.0
    %2527 = vmatpush1.msra.mxu0 0.0
    %2528 = vmatprep.subr.mxu0 0.0
    %2529 = vmatpush1.msra.mxu0 0.0
    %2530 = vmatprep.subr.mxu0 0.0
    %2531 = vmatpush1.msra.mxu0 0.0
    %2532 = vmatprep.subr.mxu0 0.0
    %2533 = vmatpush1.msra.mxu0 0.0
    %2534 = vmatprep.subr.mxu0 0.0
    %2535 = vmatpush1.msra.mxu0 0.0
    %2536 = vmatprep.subr.mxu0 0.0
    %2537 = vmatpush1.msra.mxu0 0.0
    %2538 = vmatprep.subr.mxu0 0.0
    %2539 = vmatpush1.msra.mxu0 %v2502
    %2540 = vmatprep.subr.mxu0 0.0
    %2541 = vmatpush1.msra.mxu0 %v2501
    %2542 = vmatprep.subr.mxu0 0.0
    %2543 = vmatpush1.msra.mxu0 %v2500
    %2544 = vmatprep.subr.mxu0 0.0
    %2545 = vmatpush1.msra.mxu0 %v2499
    %2546 = vmatprep.subr.mxu0 0.0
    %2547 = vmatpush2.msra.mxu0 0.0
    %2548 = vmatprep.subr.mxu0 0.0
    %2549 = vmatpush2.msra.mxu0 0.0
    %2550 = vmatprep.subr.mxu0 0.0
    %2551 = vmatpush2.msra.mxu0 0.0
    %2552 = vmatprep.subr.mxu0 0.0
    %2553 = vmatpush2.msra.mxu0 0.0
    %2554 = vmatprep.subr.mxu0 0.0
    %2555 = vmatpush2.msra.mxu0 0.0
    %2556 = vmatprep.subr.mxu0 0.0
    %2557 = vmatpush2.msra.mxu0 0.0
    %2558 = vmatprep.subr.mxu0 0.0
    %2559 = vmatpush2.msra.mxu0 0.0
    %2560 = vmatprep.subr.mxu0 0.0
    %2561 = vmatpush2.msra.mxu0 0.0
    %2562 = vmatprep.subr.mxu0 0.0
    %2563 = vmatpush2.msra.mxu0 0.0
    %2564 = vmatprep.subr.mxu0 0.0
    %2565 = vmatpush2.msra.mxu0 0.0
    %2566 = vmatprep.subr.mxu0 0.0
    %2567 = vmatpush2.msra.mxu0 0.0
    %2568 = vmatprep.subr.mxu0 0.0
    %2569 = vmatpush2.msra.mxu0 0.0
    %2570 = vmatprep.subr.mxu0 0.0
    %2571 = vmatpush2.msra.mxu0 0.0
    %2572 = vmatprep.subr.mxu0 0.0
    %2573 = vmatpush2.msra.mxu0 0.0
    %2574 = vmatprep.subr.mxu0 0.0
    %2575 = vmatpush2.msra.mxu0 0.0
    %2576 = vmatprep.subr.mxu0 0.0
    %2577 = vmatpush2.msra.mxu0 0.0
    %2578 = vmatprep.mubr.f32.mxu0 0.0
    %2579 = vmatmul.mubr.f32.gmra.mxu0 %v2512
    %v2580 = vpop.f32.mrf.mxu0
    %v2581 = vadd.f32 %v2508, %v2580
    %v2582 = vpop.f32.mrf.mxu0
    %2583 = vdwg.mxu0
    %vm2584 = vcmask 60416
    %2585 = vst.msk [vmem:[#allocation2] sm:$0xf] %vm2584, %v2581
    // Predicated region
    $region54: #{tpu_custom_call.1} parent=1 // pred_check
      _
    $region55: #{tpu_custom_call.1} parent=1 // pred_check_branch
      %2587 = sbr.rel (0) target = $region57
    $region56: #{tpu_custom_call.1} parent=1 // pred_region
      %s2589 = ssub.s32 64, 64
      %2590 = vsyncadd [#allocation3], %s2589
      %s2592 = sshll.u32 [#allocation2], 4
      %s2593 = int_to_ptr.vmem [resolvable:$true] %s2592
      %2595 = dma.vmem_to_hbm [thread:$0]  %s2593, 64, %s13, [#allocation3]
    $region57: #{tpu_custom_call.1} parent=1 // pred_fallthru
      _
    // Predicated region
    $region58: #{tpu_custom_call.1} parent=1 // pred_check
      _
    $region59: #{tpu_custom_call.1} parent=1 // pred_check_branch
      %2597 = sbr.rel (0) target = $region61
    $region60: #{tpu_custom_call.1} parent=1 // pred_region
      %2598 = dma.done [#allocation3], 64
    $region61: #{tpu_custom_call.1} parent=1 // pred_fallthru
      _
    %2599 = vsyncpa [#allocation3], 1

</llo_original>
